<compile_context>
chip_gen: v5e
topology: v5e:2x2
jax: 0.10.0
libtpu: 0.0.40
codegen_flags: <defaults>
</compile_context>

<pallas_src>
import jax
import jax.numpy as jnp
from jax import lax
from jax.experimental import pallas as pl
from jax.experimental.pallas import tpu as pltpu


# --------------------------------------------------------------------------
# Fused kernel: conv3x3 (9 tap matmuls) -> GAP -> 1x1 -> PReLU -> 1x1,
# plus the residual x + output[0] (== 2*x for the default depth).
#
#   xpad_ref   : (N, H+2, W+2, C) f32   zero-padded NHWC input (conv operand)
#   slab_ref   : (11*C + 8, C)    bf16  row-stacked parameters (single DMA):
#                  rows [0, 9C)     conv3x3 weights, tap-major (ky,kx), C_in inner
#                  rows [9C, 10C)   1x1 conv #1 weights (C_in, C_out)
#                  rows [10C, 11C)  1x1 conv #2 weights (C_in, C_out)
#                  rows [11C,11C+8) bc / b1 / alpha / b2 / 4 zero rows
#   xflat_ref  : (R, 128) f32           x flattened lane-dense (residual path)
#   res_ref    : (R, 128) f32           residual output (x + x)
#   branch_ref : (PN, PC) f32           (8,128)-padded branch; [:N, :C] valid
# --------------------------------------------------------------------------
def _fused_kernel(xpad_ref, slab_ref, xflat_ref, res_ref, branch_ref):
    N, HP, WP, C = xpad_ref.shape
    H, W = HP - 2, WP - 2
    HW = H * W
    M = N * HW

    # ---- parameters: static, sublane-aligned slices of the single slab ----
    w1 = slab_ref[9 * C:10 * C, :]                                  # (C, C) bf16
    w2 = slab_ref[10 * C:11 * C, :]                                 # (C, C) bf16
    bias = slab_ref[11 * C:11 * C + 8, :].astype(jnp.float32)       # (8, C) f32
    bc, b1, alpha, b2 = bias[0:1], bias[1:2], bias[2:3], bias[3:4]

    # ---- conv3x3: 9 accumulated tap matmuls (im2col never touches HBM) ----
    acc = jnp.zeros((M, C), jnp.float32)
    for ky in range(3):
        for kx in range(3):
            tap = ky * 3 + kx
            # shifted window of the padded input, collapsed to (M, C)
            xt = xpad_ref[:, ky:ky + H, kx:kx + W, :].reshape(M, C)
            acc = acc + jnp.dot(xt.astype(jnp.bfloat16),
                                slab_ref[tap * C:(tap + 1) * C, :],
                                preferred_element_type=jnp.float32)
    out1 = acc + bc                                                  # (M, C) f32

    # ---- AdaptiveAvgPool2d((1,1)): in-kernel pooling mask (iota+compare) ----
    img = lax.broadcasted_iota(jnp.int32, (N, M), 0)
    col = lax.broadcasted_iota(jnp.int32, (N, M), 1)
    lo = img * HW
    poolmat = jnp.where((col >= lo) & (col < lo + HW),
                        1.0 / HW, 0.0).astype(jnp.float32)           # (N, M)
    pooled = jnp.dot(poolmat, out1,
                     preferred_element_type=jnp.float32)             # (N, C)

    # ---- 1x1 conv -> PReLU -> 1x1 conv (batch folded into the MXU M dim) ----
    h = jnp.dot(pooled.astype(jnp.bfloat16), w1,
                preferred_element_type=jnp.float32) + b1
    h = jnp.where(h > 0, h, alpha * h)                               # PReLU(C)
    out = jnp.dot(h.astype(jnp.bfloat16), w2,
                  preferred_element_type=jnp.float32) + b2           # (N, C)

    # ---- branch output: one dense (8,128)-tile DMA (lane-dense out_spec) ----
    branch_ref[...] = jnp.zeros(branch_ref.shape, branch_ref.dtype)
    branch_ref[0:N, 0:C] = out.astype(branch_ref.dtype)

    # ---- residual: x + output[0] == 2*x, unmasked 128-lane f32 stores ----
    xv = xflat_ref[...]
    res_ref[...] = (xv + xv).astype(res_ref.dtype)


# --------------------------------------------------------------------------
# One-time parameter prep: all weight transposes / bias reshapes are hoisted
# here and fused into a single bf16 slab (one input DMA instead of seven).
# --------------------------------------------------------------------------
def prepare_params(params):
    C = params["b3"].shape[0]
    # (C_out, C_in, 3, 3) -> (ky, kx, C_in, C_out) -> (9*C_in, C_out)
    wc = jnp.transpose(params["w3"], (2, 3, 1, 0)).reshape(9 * C, C)
    w1 = jnp.transpose(params["w1a"])                    # (C_in, C_out)
    w2 = jnp.transpose(params["w1b"])
    bias = jnp.stack(
        [params["b3"], params["b1a"], params["alpha"], params["b1b"]]
        + [jnp.zeros((C,), jnp.float32)] * 4, axis=0)    # (8, C)
    slab = jnp.concatenate([wc, w1, w2, bias], axis=0).astype(jnp.bfloat16)
    return {"C": C, "slab": slab}                        # (11*C + 8, C) bf16


def fused_branch_and_residual(x_nchw, pp):
    """Returns (x + x, branch) with branch = conv1x1(PReLU(conv1x1(GAP(conv3x3(x)))))."""
    N, C, H, W = x_nchw.shape
    assert C == pp["C"]
    slab = pp["slab"]

    # conv operand: zero-padded NHWC (the only spatial-layout wrapper op left)
    xpad = jnp.pad(jnp.transpose(x_nchw, (0, 2, 3, 1)),
                   ((0, 0), (1, 1), (1, 1), (0, 0)))     # (N, H+2, W+2, C)

    # residual operand: lane-dense flatten, padded to a multiple of 128
    total = N * C * H * W
    r_cols = 128
    r_rows = -(-total // r_cols)
    pad_amt = r_rows * r_cols - total
    x_flat = x_nchw.reshape(-1)
    if pad_amt:
        x_flat = jnp.pad(x_flat, (0, pad_amt))
    x_flat = x_flat.reshape(r_rows, r_cols)

    # branch output padded up to a dense (8, 128) tile multiple
    PN = ((N + 7) // 8) * 8
    PC = ((C + 127) // 128) * 128

    res_flat, branch_pad = pl.pallas_call(
        _fused_kernel,
        out_shape=(jax.ShapeDtypeStruct((r_rows, r_cols), x_nchw.dtype),
                   jax.ShapeDtypeStruct((PN, PC), jnp.float32)),
        grid=(1,),   # single step: launch/DMA-latency bound at these sizes
        in_specs=[
            pl.BlockSpec(xpad.shape, lambda i: (0, 0, 0, 0)),
            pl.BlockSpec(slab.shape, lambda i: (0, 0)),
            pl.BlockSpec((r_rows, r_cols), lambda i: (0, 0)),
        ],
        out_specs=(pl.BlockSpec((r_rows, r_cols), lambda i: (0, 0)),
                   pl.BlockSpec((PN, PC), lambda i: (0, 0))),
        compiler_params=pltpu.CompilerParams(
            dimension_semantics=("arbitrary",)),
    )(xpad, slab, x_flat)

    res = res_flat.reshape(-1)[:total].reshape(N, C, H, W)
    branch = branch_pad[:N, :C]
    return res, branch


def rmse1_forward(x_nchw, prepared_params, depth=2):
    """Pallas-backed equivalent of Rmse1.forward (NCHW in / NCHW out)."""
    size = len(str(depth))
    res, _branch = fused_branch_and_residual(x_nchw, prepared_params)
    if size == 1:
        # x + output[0] == 2*x; the SE branch is a live output of the same
        # fused pallas_call, mirroring the PyTorch control flow.
        return res
    # TODO(synk): multi-digit depth (size > 1) re-feeds the (N, C, 1, 1) branch
    # through the conv stack; not exercised by the module default depth=2.
    raise NotImplementedError("only single-digit depth is supported")


# --------------------------------------------------------------------------
# Pure-JAX reference (mirrors the PyTorch graph, NCHW, f32)
# --------------------------------------------------------------------------
def _ref_branch(x_nchw, params):
    dn = ("NCHW", "OIHW", "NCHW")
    out1 = lax.conv_general_dilated(x_nchw, params["w3"], (1, 1),
                                    ((1, 1), (1, 1)), dimension_numbers=dn)
    out1 = out1 + params["b3"].reshape(1, -1, 1, 1)
    pooled = jnp.mean(out1, axis=(2, 3), keepdims=True)
    h = lax.conv_general_dilated(pooled, params["w1a"][:, :, None, None], (1, 1),
                                 "VALID", dimension_numbers=dn)
    h = h + params["b1a"].reshape(1, -1, 1, 1)
    h = jnp.where(h > 0, h, params["alpha"].reshape(1, -1, 1, 1) * h)
    out = lax.conv_general_dilated(h, params["w1b"][:, :, None, None], (1, 1),
                                   "VALID", dimension_numbers=dn)
    return out + params["b1b"].reshape(1, -1, 1, 1)


def ref_forward(x_nchw, params, depth=2):
    output = [x_nchw]
    size = len(str(depth))
    for i in range(size):
        output.append(_ref_branch(output[i], params))
    return x_nchw + output[size - 1]


# --------------------------------------------------------------------------
if __name__ == "__main__":
    N, C, H, W = 2, 64, 8, 8  # mid_channels=64 per module default; small spatial

    key = jax.random.PRNGKey(0)
    ks = jax.random.split(key, 7)
    params = {
        "w3":    jax.random.normal(ks[0], (C, C, 3, 3), jnp.float32) * 0.05,
        "b3":    jax.random.normal(ks[1], (C,), jnp.float32) * 0.05,
        "w1a":   jax.random.normal(ks[2], (C, C), jnp.float32) * 0.05,  # 1x1 conv (O, I)
        "b1a":   jax.random.normal(ks[3], (C,), jnp.float32) * 0.05,
        "alpha": jnp.full((C,), 0.25, jnp.float32),                     # PReLU default
        "w1b":   jax.random.normal(ks[4], (C, C), jnp.float32) * 0.05,
        "b1b":   jax.random.normal(ks[5], (C,), jnp.float32) * 0.05,
    }
    x = jax.random.normal(ks[6], (N, C, H, W), jnp.float32)

    pp = prepare_params(params)   # one-time param prep (slab packing, transposes)

    fwd = jax.jit(lambda xx: rmse1_forward(xx, pp, depth=2))
    fused = jax.jit(lambda xx: fused_branch_and_residual(xx, pp))

    y = fwd(x)
    res, branch = fused(x)
    jax.block_until_ready((y, res, branch))

    # references (f32)
    y_ref = ref_forward(x, params, depth=2)          # == 2*x for depth=2
    branch_ref = _ref_branch(x, params)              # (N, C, 1, 1)

    assert y.shape == x.shape and y.dtype == x.dtype
    # residual path is pure f32 -> exact
    assert jnp.allclose(y, y_ref, atol=1e-6, rtol=0)
    assert jnp.allclose(res, y_ref, atol=1e-6, rtol=0)
    # branch uses bf16 MXU operands (f32 accumulation) -> slightly looser tol
    assert jnp.allclose(branch.reshape(N, C, 1, 1), branch_ref,
                        atol=5e-3, rtol=1e-2)
    print("KERNEL_OK")
</pallas_src>

<mosaic_0001>
module attributes {stable_mosaic.version = 11 : i64} {
  func.func @_fused_kernel(%arg0: i32, %arg1: memref<2x10x10x64xf32, #tpu.memory_space<vmem>>, %arg2: memref<712x64xbf16, #tpu.memory_space<vmem>>, %arg3: memref<64x128xf32, #tpu.memory_space<vmem>>, %arg4: memref<64x128xf32, #tpu.memory_space<vmem>>, %arg5: memref<8x128xf32, #tpu.memory_space<vmem>>) attributes {dimension_semantics = [#tpu.dimension_semantics<arbitrary>], iteration_bounds = array<i64: 1>, scalar_prefetch = 0 : i64, scratch_operands = 0 : i64, tpu.core_type = #tpu.core_type<tc>, window_params = [{pipeline_mode = #tpu.pipeline_mode<synchronous>, transform_indices = @transform_0, window_bounds = array<i64: 2, 10, 10, 64>}, {pipeline_mode = #tpu.pipeline_mode<synchronous>, transform_indices = @transform_1, window_bounds = array<i64: 712, 64>}, {pipeline_mode = #tpu.pipeline_mode<synchronous>, transform_indices = @transform_2, window_bounds = array<i64: 64, 128>}, {pipeline_mode = #tpu.pipeline_mode<synchronous>, transform_indices = @transform_3, window_bounds = array<i64: 64, 128>}, {pipeline_mode = #tpu.pipeline_mode<synchronous>, transform_indices = @transform_4, window_bounds = array<i64: 8, 128>}]} {
    %c576 = arith.constant 576 : index
    %c0 = arith.constant 0 : index
    %0 = vector.load %arg2[%c576, %c0] : memref<712x64xbf16, #tpu.memory_space<vmem>>, vector<64x64xbf16>
    %c640 = arith.constant 640 : index
    %c0_0 = arith.constant 0 : index
    %1 = vector.load %arg2[%c640, %c0_0] : memref<712x64xbf16, #tpu.memory_space<vmem>>, vector<64x64xbf16>
    %c704 = arith.constant 704 : index
    %c0_1 = arith.constant 0 : index
    %2 = vector.load %arg2[%c704, %c0_1] : memref<712x64xbf16, #tpu.memory_space<vmem>>, vector<8x64xbf16>
    %3 = arith.extf %2 : vector<8x64xbf16> to vector<8x64xf32>
    %4 = vector.extract_strided_slice %3 {offsets = [0, 0], sizes = [1, 64], strides = [1, 1]} : vector<8x64xf32> to vector<1x64xf32>
    %5 = vector.extract_strided_slice %3 {offsets = [1, 0], sizes = [1, 64], strides = [1, 1]} : vector<8x64xf32> to vector<1x64xf32>
    %6 = vector.extract_strided_slice %3 {offsets = [2, 0], sizes = [1, 64], strides = [1, 1]} : vector<8x64xf32> to vector<1x64xf32>
    %7 = vector.extract_strided_slice %3 {offsets = [3, 0], sizes = [1, 64], strides = [1, 1]} : vector<8x64xf32> to vector<1x64xf32>
    %cst = arith.constant 0.000000e+00 : f32
    %8 = vector.broadcast %cst : f32 to vector<128x64xf32>
    %c0_2 = arith.constant 0 : index
    %c0_3 = arith.constant 0 : index
    %c0_4 = arith.constant 0 : index
    %c0_5 = arith.constant 0 : index
    %9 = vector.load %arg1[%c0_2, %c0_3, %c0_4, %c0_5] : memref<2x10x10x64xf32, #tpu.memory_space<vmem>>, vector<2x8x8x64xf32>
    %10 = vector.shape_cast %9 : vector<2x8x8x64xf32> to vector<128x64xf32>
    %11 = arith.truncf %10 : vector<128x64xf32> to vector<128x64xbf16>
    %c0_6 = arith.constant 0 : index
    %c0_7 = arith.constant 0 : index
    %12 = vector.load %arg2[%c0_6, %c0_7] : memref<712x64xbf16, #tpu.memory_space<vmem>>, vector<64x64xbf16>
    %cst_8 = arith.constant dense<0.000000e+00> : vector<128x64xf32>
    %13 = tpu.matmul %11, %12, %cst_8 {dimension_numbers = #tpu.dot_dimension_numbers<[1], [0], [0], [1], [0, 0, 1, 1], [], []>} : vector<128x64xbf16>, vector<64x64xbf16>, vector<128x64xf32> -> vector<128x64xf32>
    %14 = arith.addf %8, %13 : vector<128x64xf32>
    %c0_9 = arith.constant 0 : index
    %c0_10 = arith.constant 0 : index
    %c1 = arith.constant 1 : index
    %c0_11 = arith.constant 0 : index
    %15 = vector.load %arg1[%c0_9, %c0_10, %c1, %c0_11] : memref<2x10x10x64xf32, #tpu.memory_space<vmem>>, vector<2x8x8x64xf32>
    %16 = vector.shape_cast %15 : vector<2x8x8x64xf32> to vector<128x64xf32>
    %17 = arith.truncf %16 : vector<128x64xf32> to vector<128x64xbf16>
    %c64 = arith.constant 64 : index
    %c0_12 = arith.constant 0 : index
    %18 = vector.load %arg2[%c64, %c0_12] : memref<712x64xbf16, #tpu.memory_space<vmem>>, vector<64x64xbf16>
    %cst_13 = arith.constant dense<0.000000e+00> : vector<128x64xf32>
    %19 = tpu.matmul %17, %18, %cst_13 {dimension_numbers = #tpu.dot_dimension_numbers<[1], [0], [0], [1], [0, 0, 1, 1], [], []>} : vector<128x64xbf16>, vector<64x64xbf16>, vector<128x64xf32> -> vector<128x64xf32>
    %20 = arith.addf %14, %19 : vector<128x64xf32>
    %c0_14 = arith.constant 0 : index
    %c0_15 = arith.constant 0 : index
    %c2 = arith.constant 2 : index
    %c0_16 = arith.constant 0 : index
    %21 = vector.load %arg1[%c0_14, %c0_15, %c2, %c0_16] : memref<2x10x10x64xf32, #tpu.memory_space<vmem>>, vector<2x8x8x64xf32>
    %22 = vector.shape_cast %21 : vector<2x8x8x64xf32> to vector<128x64xf32>
    %23 = arith.truncf %22 : vector<128x64xf32> to vector<128x64xbf16>
    %c128 = arith.constant 128 : index
    %c0_17 = arith.constant 0 : index
    %24 = vector.load %arg2[%c128, %c0_17] : memref<712x64xbf16, #tpu.memory_space<vmem>>, vector<64x64xbf16>
    %cst_18 = arith.constant dense<0.000000e+00> : vector<128x64xf32>
    %25 = tpu.matmul %23, %24, %cst_18 {dimension_numbers = #tpu.dot_dimension_numbers<[1], [0], [0], [1], [0, 0, 1, 1], [], []>} : vector<128x64xbf16>, vector<64x64xbf16>, vector<128x64xf32> -> vector<128x64xf32>
    %26 = arith.addf %20, %25 : vector<128x64xf32>
    %c0_19 = arith.constant 0 : index
    %c1_20 = arith.constant 1 : index
    %c0_21 = arith.constant 0 : index
    %c0_22 = arith.constant 0 : index
    %27 = vector.load %arg1[%c0_19, %c1_20, %c0_21, %c0_22] : memref<2x10x10x64xf32, #tpu.memory_space<vmem>>, vector<2x8x8x64xf32>
    %28 = vector.shape_cast %27 : vector<2x8x8x64xf32> to vector<128x64xf32>
    %29 = arith.truncf %28 : vector<128x64xf32> to vector<128x64xbf16>
    %c192 = arith.constant 192 : index
    %c0_23 = arith.constant 0 : index
    %30 = vector.load %arg2[%c192, %c0_23] : memref<712x64xbf16, #tpu.memory_space<vmem>>, vector<64x64xbf16>
    %cst_24 = arith.constant dense<0.000000e+00> : vector<128x64xf32>
    %31 = tpu.matmul %29, %30, %cst_24 {dimension_numbers = #tpu.dot_dimension_numbers<[1], [0], [0], [1], [0, 0, 1, 1], [], []>} : vector<128x64xbf16>, vector<64x64xbf16>, vector<128x64xf32> -> vector<128x64xf32>
    %32 = arith.addf %26, %31 : vector<128x64xf32>
    %c0_25 = arith.constant 0 : index
    %c1_26 = arith.constant 1 : index
    %c1_27 = arith.constant 1 : index
    %c0_28 = arith.constant 0 : index
    %33 = vector.load %arg1[%c0_25, %c1_26, %c1_27, %c0_28] : memref<2x10x10x64xf32, #tpu.memory_space<vmem>>, vector<2x8x8x64xf32>
    %34 = vector.shape_cast %33 : vector<2x8x8x64xf32> to vector<128x64xf32>
    %35 = arith.truncf %34 : vector<128x64xf32> to vector<128x64xbf16>
    %c256 = arith.constant 256 : index
    %c0_29 = arith.constant 0 : index
    %36 = vector.load %arg2[%c256, %c0_29] : memref<712x64xbf16, #tpu.memory_space<vmem>>, vector<64x64xbf16>
    %cst_30 = arith.constant dense<0.000000e+00> : vector<128x64xf32>
    %37 = tpu.matmul %35, %36, %cst_30 {dimension_numbers = #tpu.dot_dimension_numbers<[1], [0], [0], [1], [0, 0, 1, 1], [], []>} : vector<128x64xbf16>, vector<64x64xbf16>, vector<128x64xf32> -> vector<128x64xf32>
    %38 = arith.addf %32, %37 : vector<128x64xf32>
    %c0_31 = arith.constant 0 : index
    %c1_32 = arith.constant 1 : index
    %c2_33 = arith.constant 2 : index
    %c0_34 = arith.constant 0 : index
    %39 = vector.load %arg1[%c0_31, %c1_32, %c2_33, %c0_34] : memref<2x10x10x64xf32, #tpu.memory_space<vmem>>, vector<2x8x8x64xf32>
    %40 = vector.shape_cast %39 : vector<2x8x8x64xf32> to vector<128x64xf32>
    %41 = arith.truncf %40 : vector<128x64xf32> to vector<128x64xbf16>
    %c320 = arith.constant 320 : index
    %c0_35 = arith.constant 0 : index
    %42 = vector.load %arg2[%c320, %c0_35] : memref<712x64xbf16, #tpu.memory_space<vmem>>, vector<64x64xbf16>
    %cst_36 = arith.constant dense<0.000000e+00> : vector<128x64xf32>
    %43 = tpu.matmul %41, %42, %cst_36 {dimension_numbers = #tpu.dot_dimension_numbers<[1], [0], [0], [1], [0, 0, 1, 1], [], []>} : vector<128x64xbf16>, vector<64x64xbf16>, vector<128x64xf32> -> vector<128x64xf32>
    %44 = arith.addf %38, %43 : vector<128x64xf32>
    %c0_37 = arith.constant 0 : index
    %c2_38 = arith.constant 2 : index
    %c0_39 = arith.constant 0 : index
    %c0_40 = arith.constant 0 : index
    %45 = vector.load %arg1[%c0_37, %c2_38, %c0_39, %c0_40] : memref<2x10x10x64xf32, #tpu.memory_space<vmem>>, vector<2x8x8x64xf32>
    %46 = vector.shape_cast %45 : vector<2x8x8x64xf32> to vector<128x64xf32>
    %47 = arith.truncf %46 : vector<128x64xf32> to vector<128x64xbf16>
    %c384 = arith.constant 384 : index
    %c0_41 = arith.constant 0 : index
    %48 = vector.load %arg2[%c384, %c0_41] : memref<712x64xbf16, #tpu.memory_space<vmem>>, vector<64x64xbf16>
    %cst_42 = arith.constant dense<0.000000e+00> : vector<128x64xf32>
    %49 = tpu.matmul %47, %48, %cst_42 {dimension_numbers = #tpu.dot_dimension_numbers<[1], [0], [0], [1], [0, 0, 1, 1], [], []>} : vector<128x64xbf16>, vector<64x64xbf16>, vector<128x64xf32> -> vector<128x64xf32>
    %50 = arith.addf %44, %49 : vector<128x64xf32>
    %c0_43 = arith.constant 0 : index
    %c2_44 = arith.constant 2 : index
    %c1_45 = arith.constant 1 : index
    %c0_46 = arith.constant 0 : index
    %51 = vector.load %arg1[%c0_43, %c2_44, %c1_45, %c0_46] : memref<2x10x10x64xf32, #tpu.memory_space<vmem>>, vector<2x8x8x64xf32>
    %52 = vector.shape_cast %51 : vector<2x8x8x64xf32> to vector<128x64xf32>
    %53 = arith.truncf %52 : vector<128x64xf32> to vector<128x64xbf16>
    %c448 = arith.constant 448 : index
    %c0_47 = arith.constant 0 : index
    %54 = vector.load %arg2[%c448, %c0_47] : memref<712x64xbf16, #tpu.memory_space<vmem>>, vector<64x64xbf16>
    %cst_48 = arith.constant dense<0.000000e+00> : vector<128x64xf32>
    %55 = tpu.matmul %53, %54, %cst_48 {dimension_numbers = #tpu.dot_dimension_numbers<[1], [0], [0], [1], [0, 0, 1, 1], [], []>} : vector<128x64xbf16>, vector<64x64xbf16>, vector<128x64xf32> -> vector<128x64xf32>
    %56 = arith.addf %50, %55 : vector<128x64xf32>
    %c0_49 = arith.constant 0 : index
    %c2_50 = arith.constant 2 : index
    %c2_51 = arith.constant 2 : index
    %c0_52 = arith.constant 0 : index
    %57 = vector.load %arg1[%c0_49, %c2_50, %c2_51, %c0_52] : memref<2x10x10x64xf32, #tpu.memory_space<vmem>>, vector<2x8x8x64xf32>
    %58 = vector.shape_cast %57 : vector<2x8x8x64xf32> to vector<128x64xf32>
    %59 = arith.truncf %58 : vector<128x64xf32> to vector<128x64xbf16>
    %c512 = arith.constant 512 : index
    %c0_53 = arith.constant 0 : index
    %60 = vector.load %arg2[%c512, %c0_53] : memref<712x64xbf16, #tpu.memory_space<vmem>>, vector<64x64xbf16>
    %cst_54 = arith.constant dense<0.000000e+00> : vector<128x64xf32>
    %61 = tpu.matmul %59, %60, %cst_54 {dimension_numbers = #tpu.dot_dimension_numbers<[1], [0], [0], [1], [0, 0, 1, 1], [], []>} : vector<128x64xbf16>, vector<64x64xbf16>, vector<128x64xf32> -> vector<128x64xf32>
    %62 = arith.addf %56, %61 : vector<128x64xf32>
    %63 = vector.broadcast %4 : vector<1x64xf32> to vector<128x64xf32>
    %64 = arith.addf %62, %63 : vector<128x64xf32>
    %65 = tpu.iota {dimensions = array<i32: 0>} : vector<2x128xi32>
    %66 = tpu.iota {dimensions = array<i32: 1>} : vector<2x128xi32>
    %c64_i32 = arith.constant 64 : i32
    %67 = vector.broadcast %c64_i32 : i32 to vector<2x128xi32>
    %68 = arith.muli %65, %67 : vector<2x128xi32>
    %69 = arith.cmpi sge, %66, %68 : vector<2x128xi32>
    %c64_i32_55 = arith.constant 64 : i32
    %70 = vector.broadcast %c64_i32_55 : i32 to vector<2x128xi32>
    %71 = arith.addi %68, %70 : vector<2x128xi32>
    %72 = arith.cmpi slt, %66, %71 : vector<2x128xi32>
    %73 = arith.andi %69, %72 : vector<2x128xi1>
    %cst_56 = arith.constant 1.562500e-02 : f32
    %cst_57 = arith.constant 0.000000e+00 : f32
    %74 = vector.broadcast %cst_56 : f32 to vector<2x128xf32>
    %75 = vector.broadcast %cst_57 : f32 to vector<2x128xf32>
    %76 = arith.select %73, %74, %75 : vector<2x128xi1>, vector<2x128xf32>
    %cst_58 = arith.constant dense<0.000000e+00> : vector<2x64xf32>
    %77 = tpu.matmul %76, %64, %cst_58 {dimension_numbers = #tpu.dot_dimension_numbers<[1], [0], [0], [1], [0, 0, 1, 1], [], []>} : vector<2x128xf32>, vector<128x64xf32>, vector<2x64xf32> -> vector<2x64xf32>
    %78 = arith.truncf %77 : vector<2x64xf32> to vector<2x64xbf16>
    %cst_59 = arith.constant dense<0.000000e+00> : vector<2x64xf32>
    %79 = tpu.matmul %78, %0, %cst_59 {dimension_numbers = #tpu.dot_dimension_numbers<[1], [0], [0], [1], [0, 0, 1, 1], [], []>} : vector<2x64xbf16>, vector<64x64xbf16>, vector<2x64xf32> -> vector<2x64xf32>
    %80 = vector.broadcast %5 : vector<1x64xf32> to vector<2x64xf32>
    %81 = arith.addf %79, %80 : vector<2x64xf32>
    %cst_60 = arith.constant 0.000000e+00 : f32
    %82 = vector.broadcast %cst_60 : f32 to vector<2x64xf32>
    %83 = arith.cmpf ogt, %81, %82 : vector<2x64xf32>
    %84 = vector.broadcast %6 : vector<1x64xf32> to vector<2x64xf32>
    %85 = arith.mulf %84, %81 : vector<2x64xf32>
    %86 = arith.select %83, %81, %85 : vector<2x64xi1>, vector<2x64xf32>
    %87 = arith.truncf %86 : vector<2x64xf32> to vector<2x64xbf16>
    %cst_61 = arith.constant dense<0.000000e+00> : vector<2x64xf32>
    %88 = tpu.matmul %87, %1, %cst_61 {dimension_numbers = #tpu.dot_dimension_numbers<[1], [0], [0], [1], [0, 0, 1, 1], [], []>} : vector<2x64xbf16>, vector<64x64xbf16>, vector<2x64xf32> -> vector<2x64xf32>
    %89 = vector.broadcast %7 : vector<1x64xf32> to vector<2x64xf32>
    %90 = arith.addf %88, %89 : vector<2x64xf32>
    %cst_62 = arith.constant 0.000000e+00 : f32
    %91 = vector.broadcast %cst_62 : f32 to vector<8x128xf32>
    %c0_63 = arith.constant 0 : index
    %c0_64 = arith.constant 0 : index
    %92 = vector.load %arg5[%c0_63, %c0_64] : memref<8x128xf32, #tpu.memory_space<vmem>>, vector<8x128xf32>
    tpu.vector_store %arg5[%c0_63, %c0_64], %91 {strides = array<i32>} : memref<8x128xf32, #tpu.memory_space<vmem>>, vector<8x128xf32>,
    %c0_65 = arith.constant 0 : index
    %c0_66 = arith.constant 0 : index
    %93 = vector.load %arg5[%c0_65, %c0_66] : memref<8x128xf32, #tpu.memory_space<vmem>>, vector<2x64xf32>
    tpu.vector_store %arg5[%c0_65, %c0_66], %90 {strides = array<i32>} : memref<8x128xf32, #tpu.memory_space<vmem>>, vector<2x64xf32>,
    %c0_67 = arith.constant 0 : index
    %c0_68 = arith.constant 0 : index
    %94 = vector.load %arg3[%c0_67, %c0_68] : memref<64x128xf32, #tpu.memory_space<vmem>>, vector<64x128xf32>
    %95 = arith.addf %94, %94 : vector<64x128xf32>
    %c0_69 = arith.constant 0 : index
    %c0_70 = arith.constant 0 : index
    %96 = vector.load %arg4[%c0_69, %c0_70] : memref<64x128xf32, #tpu.memory_space<vmem>>, vector<64x128xf32>
    tpu.vector_store %arg4[%c0_69, %c0_70], %95 {strides = array<i32>} : memref<64x128xf32, #tpu.memory_space<vmem>>, vector<64x128xf32>,
    return
  }
  func.func @transform_0(%arg0: i32) -> (i32, i32, i32, i32) {
    %c0_i32 = arith.constant 0 : i32
    %c0_i32_0 = arith.constant 0 : i32
    %c0_i32_1 = arith.constant 0 : i32
    %c0_i32_2 = arith.constant 0 : i32
    %c0_i32_3 = arith.constant 0 : i32
    return %c0_i32, %c0_i32_0, %c0_i32_1, %c0_i32_2 : i32, i32, i32, i32
  }
  func.func @transform_1(%arg0: i32) -> (i32, i32) {
    %c0_i32 = arith.constant 0 : i32
    %c0_i32_0 = arith.constant 0 : i32
    %c0_i32_1 = arith.constant 0 : i32
    return %c0_i32, %c0_i32_0 : i32, i32
  }
  func.func @transform_2(%arg0: i32) -> (i32, i32) {
    %c0_i32 = arith.constant 0 : i32
    %c0_i32_0 = arith.constant 0 : i32
    %c0_i32_1 = arith.constant 0 : i32
    return %c0_i32, %c0_i32_0 : i32, i32
  }
  func.func @transform_3(%arg0: i32) -> (i32, i32) {
    %c0_i32 = arith.constant 0 : i32
    %c0_i32_0 = arith.constant 0 : i32
    %c0_i32_1 = arith.constant 0 : i32
    return %c0_i32, %c0_i32_0 : i32, i32
  }
  func.func @transform_4(%arg0: i32) -> (i32, i32) {
    %c0_i32 = arith.constant 0 : i32
    %c0_i32_0 = arith.constant 0 : i32
    %c0_i32_1 = arith.constant 0 : i32
    return %c0_i32, %c0_i32_0 : i32, i32
  }
}

</mosaic_0001>

<llo_original>
// kernel: _lambda_.1
$region0: #{_lambda_.1}
  #allocation0 [shape = 'u32[]', space=smem, size = 0x4, offset = 0x4, fixed_abs, tag = 'smem constant byte address 0x4 - core index']
  #allocation1 [shape = 'u32[72,128]{1,0:T(1,128)}', space=vmem, size = 0x9000, scoped, tag = 'internal scratch']
  %s0 = inlined_call_operand.vmem [shape: f32[2,10,10,64], index: 0, kind: input, shape index: {}]
  %s1 = inlined_call_operand.vmem [shape: bf16[712,64], index: 1, kind: input, shape index: {}]
  %s2 = inlined_call_operand.vmem [shape: f32[64,128], index: 2, kind: input, shape index: {}]
  %s3 = inlined_call_operand.vmem [shape: f32[64,128], index: 3, kind: output, shape index: {0}]
  %s4 = inlined_call_operand.hbm [shape: f32[8,128], index: 4, kind: output, shape index: {1}]
  %5 = xla_tuple %s3, %s4
  %s6 = sld [smem:[#allocation0]]
  $region30: #{_lambda_.1} parent=0
    _
  %s8 = ssub.s32 1, %s6
  %s9 = scalar_select 0, %s8, %s6
  $region1: #{_lambda_.1} parent=0
    #allocation2 [shape = 'u8[4096]{0}', space=vmem, size = 0x1000, scoped, tag = 'output window, operand 1, single buffered']
    #allocation3 [shape = 's32[1]{0}', space=sflag, size = 0x4, scoped, tag = 'scoped memory for _lambda_.1']
    %10 = vsyncpa [#allocation3], 0
    // Predicated region
    $region2: #{_lambda_.1} parent=1 // pred_check
      _
    $region3: #{_lambda_.1} parent=1 // pred_check_branch
      %12 = sbr.rel (0) target = $region5
    $region4: #{_lambda_.1} parent=1 // pred_region
      _
    $region5: #{_lambda_.1} parent=1 // pred_fallthru
      _
    // Predicated region
    $region6: #{_lambda_.1} parent=1 // pred_check
      _
    $region7: #{_lambda_.1} parent=1 // pred_check_branch
      %14 = sbr.rel (0) target = $region9
    $region8: #{_lambda_.1} parent=1 // pred_region
      _
    $region9: #{_lambda_.1} parent=1 // pred_fallthru
      _
    // Predicated region
    $region10: #{_lambda_.1} parent=1 // pred_check
      _
    $region11: #{_lambda_.1} parent=1 // pred_check_branch
      %16 = sbr.rel (0) target = $region13
    $region12: #{_lambda_.1} parent=1 // pred_region
      _
    $region13: #{_lambda_.1} parent=1 // pred_fallthru
      _
    %v18 = vld [vmem:[%s1 + $0x120] sm:$0xf]
    %v19 = vld [vmem:[%s1 + $0x124] sm:$0xf]
    %v20 = vld [vmem:[%s1 + $0x128] sm:$0xf]
    %v21 = vld [vmem:[%s1 + $0x12c] sm:$0xf]
    %v22 = vld [vmem:[%s1 + $0x130] sm:$0xf]
    %v23 = vld [vmem:[%s1 + $0x134] sm:$0xf]
    %v24 = vld [vmem:[%s1 + $0x138] sm:$0xf]
    %v25 = vld [vmem:[%s1 + $0x13c] sm:$0xf]
    %v26 = vld [vmem:[%s1 + $0x140] sm:$0xf]
    %v27 = vld [vmem:[%s1 + $0x144] sm:$0xf]
    %v28 = vld [vmem:[%s1 + $0x148] sm:$0xf]
    %v29 = vld [vmem:[%s1 + $0x14c] sm:$0xf]
    %v30 = vld [vmem:[%s1 + $0x150] sm:$0xf]
    %v31 = vld [vmem:[%s1 + $0x154] sm:$0xf]
    %v32 = vld [vmem:[%s1 + $0x158] sm:$0xf]
    %v33 = vld [vmem:[%s1 + $0x15c] sm:$0xf]
    %v34 = vld [vmem:[%s1 + $0x160] sm:$0xf]
    %v35 = vunpack.c.l.bf16 %v34
    %v36 = vld [vmem:[%s0] sm:$0xff]
    %v37 = vld [vmem:[%s0 + $0x10] sm:$0xff]
    %v38 = vld [vmem:[%s0 + $0x20] sm:$0xff]
    %v39 = vld [vmem:[%s0 + $0x30] sm:$0xff]
    %v40 = vld [vmem:[%s0 + $0x40] sm:$0xff]
    %v41 = vld [vmem:[%s0 + $0x50] sm:$0xff]
    %v42 = vld [vmem:[%s0 + $0x60] sm:$0xff]
    %v43 = vld [vmem:[%s0 + $0x70] sm:$0xff]
    %v44 = vld [vmem:[%s0 + $0xa0] sm:$0xff]
    %v45 = vld [vmem:[%s0 + $0xb0] sm:$0xff]
    %v46 = vld [vmem:[%s0 + $0xc0] sm:$0xff]
    %v47 = vld [vmem:[%s0 + $0xd0] sm:$0xff]
    %v48 = vld [vmem:[%s0 + $0xe0] sm:$0xff]
    %v49 = vld [vmem:[%s0 + $0xf0] sm:$0xff]
    %v50 = vld [vmem:[%s0 + $0x100] sm:$0xff]
    %v51 = vld [vmem:[%s0 + $0x110] sm:$0xff]
    %v52 = vpack.c.bf16 %v37, %v36
    %v53 = vpack.c.bf16 %v39, %v38
    %v54 = vpack.c.bf16 %v41, %v40
    %v55 = vpack.c.bf16 %v43, %v42
    %v56 = vpack.c.bf16 %v45, %v44
    %v57 = vpack.c.bf16 %v47, %v46
    %v58 = vpack.c.bf16 %v49, %v48
    %v59 = vpack.c.bf16 %v51, %v50
    %v60 = vld [vmem:[%s1] sm:$0xf]
    %v61 = vld [vmem:[%s1 + $0x4] sm:$0xf]
    %v62 = vld [vmem:[%s1 + $0x8] sm:$0xf]
    %v63 = vld [vmem:[%s1 + $0xc] sm:$0xf]
    %v64 = vld [vmem:[%s1 + $0x10] sm:$0xf]
    %v65 = vld [vmem:[%s1 + $0x14] sm:$0xf]
    %v66 = vld [vmem:[%s1 + $0x18] sm:$0xf]
    %v67 = vld [vmem:[%s1 + $0x1c] sm:$0xf]
    %v68 = vld [vmem:[%s0 + $0x1] sm:$0xff]
    %v69 = vld [vmem:[%s0 + $0x11] sm:$0xff]
    %v70 = vld [vmem:[%s0 + $0x21] sm:$0xff]
    %v71 = vld [vmem:[%s0 + $0x31] sm:$0xff]
    %v72 = vld [vmem:[%s0 + $0x41] sm:$0xff]
    %v73 = vld [vmem:[%s0 + $0x51] sm:$0xff]
    %v74 = vld [vmem:[%s0 + $0x61] sm:$0xff]
    %v75 = vld [vmem:[%s0 + $0x71] sm:$0xff]
    %v76 = vld [vmem:[%s0 + $0xa1] sm:$0xff]
    %v77 = vld [vmem:[%s0 + $0xb1] sm:$0xff]
    %v78 = vld [vmem:[%s0 + $0xc1] sm:$0xff]
    %v79 = vld [vmem:[%s0 + $0xd1] sm:$0xff]
    %v80 = vld [vmem:[%s0 + $0xe1] sm:$0xff]
    %v81 = vld [vmem:[%s0 + $0xf1] sm:$0xff]
    %v82 = vld [vmem:[%s0 + $0x101] sm:$0xff]
    %v83 = vld [vmem:[%s0 + $0x111] sm:$0xff]
    %v84 = vpack.c.bf16 %v69, %v68
    %v85 = vpack.c.bf16 %v71, %v70
    %v86 = vpack.c.bf16 %v73, %v72
    %v87 = vpack.c.bf16 %v75, %v74
    %v88 = vpack.c.bf16 %v77, %v76
    %v89 = vpack.c.bf16 %v79, %v78
    %v90 = vpack.c.bf16 %v81, %v80
    %v91 = vpack.c.bf16 %v83, %v82
    %v92 = vld [vmem:[%s1 + $0x20] sm:$0xf]
    %v93 = vld [vmem:[%s1 + $0x24] sm:$0xf]
    %v94 = vld [vmem:[%s1 + $0x28] sm:$0xf]
    %v95 = vld [vmem:[%s1 + $0x2c] sm:$0xf]
    %v96 = vld [vmem:[%s1 + $0x30] sm:$0xf]
    %v97 = vld [vmem:[%s1 + $0x34] sm:$0xf]
    %v98 = vld [vmem:[%s1 + $0x38] sm:$0xf]
    %v99 = vld [vmem:[%s1 + $0x3c] sm:$0xf]
    %v108 = vunpack.c.l.b16 %v92
    %v109 = vunpack.c.l.b16 %v93
    %v110 = vunpack.c.l.b16 %v94
    %v111 = vunpack.c.l.b16 %v95
    %v112 = vunpack.c.l.b16 %v96
    %v113 = vunpack.c.l.b16 %v97
    %v114 = vunpack.c.l.b16 %v98
    %v115 = vunpack.c.l.b16 %v99
    %v116 = vpack.c.b16 %v109, %v108
    %v117 = vpack.c.b16 %v111, %v110
    %v118 = vpack.c.b16 %v113, %v112
    %v119 = vpack.c.b16 %v115, %v114
    %vm124 = vcmask 523264
    %v126 = vsel %vm124, %v84, 0
    %v129 = vsel %vm124, %v85, 0
    %v132 = vsel %vm124, %v86, 0
    %v135 = vsel %vm124, %v87, 0
    %v138 = vsel %vm124, %v88, 0
    %v141 = vsel %vm124, %v89, 0
    %v144 = vsel %vm124, %v90, 0
    %v147 = vsel %vm124, %v91, 0
    %149 = vmatpush.bf16.msra.mxu0 0
    %150 = vmatpush.bf16.msra.mxu0 0
    %151 = vmatpush.bf16.msra.mxu0 0
    %152 = vmatpush.bf16.msra.mxu0 0
    %153 = vmatpush.bf16.msra.mxu0 %v119
    %154 = vmatpush.bf16.msra.mxu0 %v118
    %155 = vmatpush.bf16.msra.mxu0 %v117
    %156 = vmatpush.bf16.msra.mxu0 %v116
    %157 = vmatmul.bf16.gmra.mxu0 %v126
    %v158 = vpop.f32.mrf.mxu0
    %v159 = vadd.f32 0.0, %v158
    %v160 = vpop.f32.mrf.mxu0
    %v161 = vadd.f32 0.0, %v160
    %162 = vmatmul.bf16.gmra.mxu0 %v129
    %v163 = vpop.f32.mrf.mxu0
    %v164 = vadd.f32 0.0, %v163
    %v165 = vpop.f32.mrf.mxu0
    %v166 = vadd.f32 0.0, %v165
    %167 = vmatmul.bf16.gmra.mxu0 %v132
    %v168 = vpop.f32.mrf.mxu0
    %v169 = vadd.f32 0.0, %v168
    %v170 = vpop.f32.mrf.mxu0
    %v171 = vadd.f32 0.0, %v170
    %172 = vmatmul.bf16.gmra.mxu0 %v135
    %v173 = vpop.f32.mrf.mxu0
    %v174 = vadd.f32 0.0, %v173
    %v175 = vpop.f32.mrf.mxu0
    %v176 = vadd.f32 0.0, %v175
    %177 = vmatmul.bf16.gmra.mxu0 %v138
    %v178 = vpop.f32.mrf.mxu0
    %v179 = vadd.f32 0.0, %v178
    %v180 = vpop.f32.mrf.mxu0
    %v181 = vadd.f32 0.0, %v180
    %182 = vmatmul.bf16.gmra.mxu0 %v141
    %v183 = vpop.f32.mrf.mxu0
    %v184 = vadd.f32 0.0, %v183
    %v185 = vpop.f32.mrf.mxu0
    %v186 = vadd.f32 0.0, %v185
    %187 = vmatmul.bf16.gmra.mxu0 %v144
    %v188 = vpop.f32.mrf.mxu0
    %v189 = vadd.f32 0.0, %v188
    %v190 = vpop.f32.mrf.mxu0
    %v191 = vadd.f32 0.0, %v190
    %192 = vmatmul.bf16.gmra.mxu0 %v147
    %v193 = vpop.f32.mrf.mxu0
    %v194 = vadd.f32 0.0, %v193
    %v195 = vpop.f32.mrf.mxu0
    %v196 = vadd.f32 0.0, %v195
    %197 = vdwg.mxu0
    %v206 = vunpack.c.l.b16 %v60
    %v207 = vunpack.c.l.b16 %v61
    %v208 = vunpack.c.l.b16 %v62
    %v209 = vunpack.c.l.b16 %v63
    %v210 = vunpack.c.l.b16 %v64
    %v211 = vunpack.c.l.b16 %v65
    %v212 = vunpack.c.l.b16 %v66
    %v213 = vunpack.c.l.b16 %v67
    %v214 = vpack.c.b16 %v207, %v206
    %v215 = vpack.c.b16 %v209, %v208
    %v216 = vpack.c.b16 %v211, %v210
    %v217 = vpack.c.b16 %v213, %v212
    %v223 = vsel %vm124, %v52, 0
    %v226 = vsel %vm124, %v53, 0
    %v229 = vsel %vm124, %v54, 0
    %v232 = vsel %vm124, %v55, 0
    %v235 = vsel %vm124, %v56, 0
    %v238 = vsel %vm124, %v57, 0
    %v241 = vsel %vm124, %v58, 0
    %v244 = vsel %vm124, %v59, 0
    %246 = vmatpush.bf16.msra.mxu0 0
    %247 = vmatpush.bf16.msra.mxu0 0
    %248 = vmatpush.bf16.msra.mxu0 0
    %249 = vmatpush.bf16.msra.mxu0 0
    %250 = vmatpush.bf16.msra.mxu0 %v217
    %251 = vmatpush.bf16.msra.mxu0 %v216
    %252 = vmatpush.bf16.msra.mxu0 %v215
    %253 = vmatpush.bf16.msra.mxu0 %v214
    %254 = vmatmul.bf16.gmra.mxu0 %v223
    %v255 = vpop.f32.mrf.mxu0
    %v256 = vadd.f32 %v159, %v255
    %v257 = vpop.f32.mrf.mxu0
    %v258 = vadd.f32 %v161, %v257
    %259 = vmatmul.bf16.gmra.mxu0 %v226
    %v260 = vpop.f32.mrf.mxu0
    %v261 = vadd.f32 %v164, %v260
    %v262 = vpop.f32.mrf.mxu0
    %v263 = vadd.f32 %v166, %v262
    %264 = vmatmul.bf16.gmra.mxu0 %v229
    %v265 = vpop.f32.mrf.mxu0
    %v266 = vadd.f32 %v169, %v265
    %v267 = vpop.f32.mrf.mxu0
    %v268 = vadd.f32 %v171, %v267
    %269 = vmatmul.bf16.gmra.mxu0 %v232
    %v270 = vpop.f32.mrf.mxu0
    %v271 = vadd.f32 %v174, %v270
    %v272 = vpop.f32.mrf.mxu0
    %v273 = vadd.f32 %v176, %v272
    %274 = vmatmul.bf16.gmra.mxu0 %v235
    %v275 = vpop.f32.mrf.mxu0
    %v276 = vadd.f32 %v179, %v275
    %v277 = vpop.f32.mrf.mxu0
    %v278 = vadd.f32 %v181, %v277
    %279 = vmatmul.bf16.gmra.mxu0 %v238
    %v280 = vpop.f32.mrf.mxu0
    %v281 = vadd.f32 %v184, %v280
    %v282 = vpop.f32.mrf.mxu0
    %v283 = vadd.f32 %v186, %v282
    %284 = vmatmul.bf16.gmra.mxu0 %v241
    %v285 = vpop.f32.mrf.mxu0
    %v286 = vadd.f32 %v189, %v285
    %v287 = vpop.f32.mrf.mxu0
    %v288 = vadd.f32 %v191, %v287
    %289 = vmatmul.bf16.gmra.mxu0 %v244
    %v290 = vpop.f32.mrf.mxu0
    %v291 = vadd.f32 %v194, %v290
    %v292 = vpop.f32.mrf.mxu0
    %v293 = vadd.f32 %v196, %v292
    %294 = vdwg.mxu0
    %v295 = vld [vmem:[%s0 + $0x2] sm:$0xff]
    %v296 = vld [vmem:[%s0 + $0x12] sm:$0xff]
    %v297 = vld [vmem:[%s0 + $0x22] sm:$0xff]
    %v298 = vld [vmem:[%s0 + $0x32] sm:$0xff]
    %v299 = vld [vmem:[%s0 + $0x42] sm:$0xff]
    %v300 = vld [vmem:[%s0 + $0x52] sm:$0xff]
    %v301 = vld [vmem:[%s0 + $0x62] sm:$0xff]
    %v302 = vld [vmem:[%s0 + $0x72] sm:$0xff]
    %v303 = vld [vmem:[%s0 + $0xa2] sm:$0xff]
    %v304 = vld [vmem:[%s0 + $0xb2] sm:$0xff]
    %v305 = vld [vmem:[%s0 + $0xc2] sm:$0xff]
    %v306 = vld [vmem:[%s0 + $0xd2] sm:$0xff]
    %v307 = vld [vmem:[%s0 + $0xe2] sm:$0xff]
    %v308 = vld [vmem:[%s0 + $0xf2] sm:$0xff]
    %v309 = vld [vmem:[%s0 + $0x102] sm:$0xff]
    %v310 = vld [vmem:[%s0 + $0x112] sm:$0xff]
    %v311 = vpack.c.bf16 %v296, %v295
    %v312 = vpack.c.bf16 %v298, %v297
    %v313 = vpack.c.bf16 %v300, %v299
    %v314 = vpack.c.bf16 %v302, %v301
    %v315 = vpack.c.bf16 %v304, %v303
    %v316 = vpack.c.bf16 %v306, %v305
    %v317 = vpack.c.bf16 %v308, %v307
    %v318 = vpack.c.bf16 %v310, %v309
    %v319 = vld [vmem:[%s1 + $0x40] sm:$0xf]
    %v320 = vld [vmem:[%s1 + $0x44] sm:$0xf]
    %v321 = vld [vmem:[%s1 + $0x48] sm:$0xf]
    %v322 = vld [vmem:[%s1 + $0x4c] sm:$0xf]
    %v323 = vld [vmem:[%s1 + $0x50] sm:$0xf]
    %v324 = vld [vmem:[%s1 + $0x54] sm:$0xf]
    %v325 = vld [vmem:[%s1 + $0x58] sm:$0xf]
    %v326 = vld [vmem:[%s1 + $0x5c] sm:$0xf]
    %v335 = vunpack.c.l.b16 %v319
    %v336 = vunpack.c.l.b16 %v320
    %v337 = vunpack.c.l.b16 %v321
    %v338 = vunpack.c.l.b16 %v322
    %v339 = vunpack.c.l.b16 %v323
    %v340 = vunpack.c.l.b16 %v324
    %v341 = vunpack.c.l.b16 %v325
    %v342 = vunpack.c.l.b16 %v326
    %v343 = vpack.c.b16 %v336, %v335
    %v344 = vpack.c.b16 %v338, %v337
    %v345 = vpack.c.b16 %v340, %v339
    %v346 = vpack.c.b16 %v342, %v341
    %v352 = vsel %vm124, %v311, 0
    %v355 = vsel %vm124, %v312, 0
    %v358 = vsel %vm124, %v313, 0
    %v361 = vsel %vm124, %v314, 0
    %v364 = vsel %vm124, %v315, 0
    %v367 = vsel %vm124, %v316, 0
    %v370 = vsel %vm124, %v317, 0
    %v373 = vsel %vm124, %v318, 0
    %375 = vmatpush.bf16.msra.mxu0 0
    %376 = vmatpush.bf16.msra.mxu0 0
    %377 = vmatpush.bf16.msra.mxu0 0
    %378 = vmatpush.bf16.msra.mxu0 0
    %379 = vmatpush.bf16.msra.mxu0 %v346
    %380 = vmatpush.bf16.msra.mxu0 %v345
    %381 = vmatpush.bf16.msra.mxu0 %v344
    %382 = vmatpush.bf16.msra.mxu0 %v343
    %383 = vmatmul.bf16.gmra.mxu0 %v352
    %v384 = vpop.f32.mrf.mxu0
    %v385 = vadd.f32 0.0, %v384
    %v386 = vpop.f32.mrf.mxu0
    %v387 = vadd.f32 0.0, %v386
    %388 = vmatmul.bf16.gmra.mxu0 %v355
    %v389 = vpop.f32.mrf.mxu0
    %v390 = vadd.f32 0.0, %v389
    %v391 = vpop.f32.mrf.mxu0
    %v392 = vadd.f32 0.0, %v391
    %393 = vmatmul.bf16.gmra.mxu0 %v358
    %v394 = vpop.f32.mrf.mxu0
    %v395 = vadd.f32 0.0, %v394
    %v396 = vpop.f32.mrf.mxu0
    %v397 = vadd.f32 0.0, %v396
    %398 = vmatmul.bf16.gmra.mxu0 %v361
    %v399 = vpop.f32.mrf.mxu0
    %v400 = vadd.f32 0.0, %v399
    %v401 = vpop.f32.mrf.mxu0
    %v402 = vadd.f32 0.0, %v401
    %403 = vmatmul.bf16.gmra.mxu0 %v364
    %v404 = vpop.f32.mrf.mxu0
    %v405 = vadd.f32 0.0, %v404
    %v406 = vpop.f32.mrf.mxu0
    %v407 = vadd.f32 0.0, %v406
    %408 = vmatmul.bf16.gmra.mxu0 %v367
    %v409 = vpop.f32.mrf.mxu0
    %v410 = vadd.f32 0.0, %v409
    %v411 = vpop.f32.mrf.mxu0
    %v412 = vadd.f32 0.0, %v411
    %413 = vmatmul.bf16.gmra.mxu0 %v370
    %v414 = vpop.f32.mrf.mxu0
    %v415 = vadd.f32 0.0, %v414
    %v416 = vpop.f32.mrf.mxu0
    %v417 = vadd.f32 0.0, %v416
    %418 = vmatmul.bf16.gmra.mxu0 %v373
    %v419 = vpop.f32.mrf.mxu0
    %v420 = vadd.f32 0.0, %v419
    %v421 = vpop.f32.mrf.mxu0
    %v422 = vadd.f32 0.0, %v421
    %423 = vdwg.mxu0
    %v424 = vadd.f32 %v256, %v385
    %v425 = vadd.f32 %v258, %v387
    %v426 = vadd.f32 %v261, %v390
    %v427 = vadd.f32 %v263, %v392
    %v428 = vadd.f32 %v266, %v395
    %v429 = vadd.f32 %v268, %v397
    %v430 = vadd.f32 %v271, %v400
    %v431 = vadd.f32 %v273, %v402
    %v432 = vadd.f32 %v276, %v405
    %v433 = vadd.f32 %v278, %v407
    %v434 = vadd.f32 %v281, %v410
    %v435 = vadd.f32 %v283, %v412
    %v436 = vadd.f32 %v286, %v415
    %v437 = vadd.f32 %v288, %v417
    %v438 = vadd.f32 %v291, %v420
    %v439 = vadd.f32 %v293, %v422
    %s440 = scalar_lea.vmem %s0, 16
    %v441 = vld [vmem:[%s440] sm:$0xff]
    %v442 = vld [vmem:[%s440 + $0x10] sm:$0xff]
    %v443 = vld [vmem:[%s440 + $0x20] sm:$0xff]
    %v444 = vld [vmem:[%s440 + $0x30] sm:$0xff]
    %v445 = vld [vmem:[%s440 + $0x40] sm:$0xff]
    %v446 = vld [vmem:[%s440 + $0x50] sm:$0xff]
    %v447 = vld [vmem:[%s440 + $0x60] sm:$0xff]
    %v448 = vld [vmem:[%s440 + $0x70] sm:$0xff]
    %v449 = vld [vmem:[%s440 + $0xa0] sm:$0xff]
    %v450 = vld [vmem:[%s440 + $0xb0] sm:$0xff]
    %v451 = vld [vmem:[%s440 + $0xc0] sm:$0xff]
    %v452 = vld [vmem:[%s440 + $0xd0] sm:$0xff]
    %v453 = vld [vmem:[%s440 + $0xe0] sm:$0xff]
    %v454 = vld [vmem:[%s440 + $0xf0] sm:$0xff]
    %v455 = vld [vmem:[%s440 + $0x100] sm:$0xff]
    %v456 = vld [vmem:[%s440 + $0x110] sm:$0xff]
    %v457 = vpack.c.bf16 %v442, %v441
    %v458 = vpack.c.bf16 %v444, %v443
    %v459 = vpack.c.bf16 %v446, %v445
    %v460 = vpack.c.bf16 %v448, %v447
    %v461 = vpack.c.bf16 %v450, %v449
    %v462 = vpack.c.bf16 %v452, %v451
    %v463 = vpack.c.bf16 %v454, %v453
    %v464 = vpack.c.bf16 %v456, %v455
    %v465 = vld [vmem:[%s1 + $0x60] sm:$0xf]
    %v466 = vld [vmem:[%s1 + $0x64] sm:$0xf]
    %v467 = vld [vmem:[%s1 + $0x68] sm:$0xf]
    %v468 = vld [vmem:[%s1 + $0x6c] sm:$0xf]
    %v469 = vld [vmem:[%s1 + $0x70] sm:$0xf]
    %v470 = vld [vmem:[%s1 + $0x74] sm:$0xf]
    %v471 = vld [vmem:[%s1 + $0x78] sm:$0xf]
    %v472 = vld [vmem:[%s1 + $0x7c] sm:$0xf]
    %v481 = vunpack.c.l.b16 %v465
    %v482 = vunpack.c.l.b16 %v466
    %v483 = vunpack.c.l.b16 %v467
    %v484 = vunpack.c.l.b16 %v468
    %v485 = vunpack.c.l.b16 %v469
    %v486 = vunpack.c.l.b16 %v470
    %v487 = vunpack.c.l.b16 %v471
    %v488 = vunpack.c.l.b16 %v472
    %v489 = vpack.c.b16 %v482, %v481
    %v490 = vpack.c.b16 %v484, %v483
    %v491 = vpack.c.b16 %v486, %v485
    %v492 = vpack.c.b16 %v488, %v487
    %v498 = vsel %vm124, %v457, 0
    %v501 = vsel %vm124, %v458, 0
    %v504 = vsel %vm124, %v459, 0
    %v507 = vsel %vm124, %v460, 0
    %v510 = vsel %vm124, %v461, 0
    %v513 = vsel %vm124, %v462, 0
    %v516 = vsel %vm124, %v463, 0
    %v519 = vsel %vm124, %v464, 0
    %521 = vmatpush.bf16.msra.mxu0 0
    %522 = vmatpush.bf16.msra.mxu0 0
    %523 = vmatpush.bf16.msra.mxu0 0
    %524 = vmatpush.bf16.msra.mxu0 0
    %525 = vmatpush.bf16.msra.mxu0 %v492
    %526 = vmatpush.bf16.msra.mxu0 %v491
    %527 = vmatpush.bf16.msra.mxu0 %v490
    %528 = vmatpush.bf16.msra.mxu0 %v489
    %529 = vmatmul.bf16.gmra.mxu0 %v498
    %v530 = vpop.f32.mrf.mxu0
    %v531 = vadd.f32 0.0, %v530
    %v532 = vpop.f32.mrf.mxu0
    %v533 = vadd.f32 0.0, %v532
    %534 = vmatmul.bf16.gmra.mxu0 %v501
    %v535 = vpop.f32.mrf.mxu0
    %v536 = vadd.f32 0.0, %v535
    %v537 = vpop.f32.mrf.mxu0
    %v538 = vadd.f32 0.0, %v537
    %539 = vmatmul.bf16.gmra.mxu0 %v504
    %v540 = vpop.f32.mrf.mxu0
    %v541 = vadd.f32 0.0, %v540
    %v542 = vpop.f32.mrf.mxu0
    %v543 = vadd.f32 0.0, %v542
    %544 = vmatmul.bf16.gmra.mxu0 %v507
    %v545 = vpop.f32.mrf.mxu0
    %v546 = vadd.f32 0.0, %v545
    %v547 = vpop.f32.mrf.mxu0
    %v548 = vadd.f32 0.0, %v547
    %549 = vmatmul.bf16.gmra.mxu0 %v510
    %v550 = vpop.f32.mrf.mxu0
    %v551 = vadd.f32 0.0, %v550
    %v552 = vpop.f32.mrf.mxu0
    %v553 = vadd.f32 0.0, %v552
    %554 = vmatmul.bf16.gmra.mxu0 %v513
    %v555 = vpop.f32.mrf.mxu0
    %v556 = vadd.f32 0.0, %v555
    %v557 = vpop.f32.mrf.mxu0
    %v558 = vadd.f32 0.0, %v557
    %559 = vmatmul.bf16.gmra.mxu0 %v516
    %v560 = vpop.f32.mrf.mxu0
    %v561 = vadd.f32 0.0, %v560
    %v562 = vpop.f32.mrf.mxu0
    %v563 = vadd.f32 0.0, %v562
    %564 = vmatmul.bf16.gmra.mxu0 %v519
    %v565 = vpop.f32.mrf.mxu0
    %v566 = vadd.f32 0.0, %v565
    %v567 = vpop.f32.mrf.mxu0
    %v568 = vadd.f32 0.0, %v567
    %569 = vdwg.mxu0
    %v570 = vadd.f32 %v424, %v531
    %v571 = vadd.f32 %v425, %v533
    %v572 = vadd.f32 %v426, %v536
    %v573 = vadd.f32 %v427, %v538
    %v574 = vadd.f32 %v428, %v541
    %v575 = vadd.f32 %v429, %v543
    %v576 = vadd.f32 %v430, %v546
    %v577 = vadd.f32 %v431, %v548
    %v578 = vadd.f32 %v432, %v551
    %v579 = vadd.f32 %v433, %v553
    %v580 = vadd.f32 %v434, %v556
    %v581 = vadd.f32 %v435, %v558
    %v582 = vadd.f32 %v436, %v561
    %v583 = vadd.f32 %v437, %v563
    %v584 = vadd.f32 %v438, %v566
    %v585 = vadd.f32 %v439, %v568
    %v586 = vld [vmem:[%s440 + $0x1] sm:$0xff]
    %v587 = vld [vmem:[%s440 + $0x11] sm:$0xff]
    %v588 = vld [vmem:[%s440 + $0x21] sm:$0xff]
    %v589 = vld [vmem:[%s440 + $0x31] sm:$0xff]
    %v590 = vld [vmem:[%s440 + $0x41] sm:$0xff]
    %v591 = vld [vmem:[%s440 + $0x51] sm:$0xff]
    %v592 = vld [vmem:[%s440 + $0x61] sm:$0xff]
    %v593 = vld [vmem:[%s440 + $0x71] sm:$0xff]
    %v594 = vld [vmem:[%s440 + $0xa1] sm:$0xff]
    %v595 = vld [vmem:[%s440 + $0xb1] sm:$0xff]
    %v596 = vld [vmem:[%s440 + $0xc1] sm:$0xff]
    %v597 = vld [vmem:[%s440 + $0xd1] sm:$0xff]
    %v598 = vld [vmem:[%s440 + $0xe1] sm:$0xff]
    %v599 = vld [vmem:[%s440 + $0xf1] sm:$0xff]
    %v600 = vld [vmem:[%s440 + $0x101] sm:$0xff]
    %v601 = vld [vmem:[%s440 + $0x111] sm:$0xff]
    %v602 = vpack.c.bf16 %v587, %v586
    %v603 = vpack.c.bf16 %v589, %v588
    %v604 = vpack.c.bf16 %v591, %v590
    %v605 = vpack.c.bf16 %v593, %v592
    %v606 = vpack.c.bf16 %v595, %v594
    %v607 = vpack.c.bf16 %v597, %v596
    %v608 = vpack.c.bf16 %v599, %v598
    %v609 = vpack.c.bf16 %v601, %v600
    %v610 = vld [vmem:[%s1 + $0x80] sm:$0xf]
    %v611 = vld [vmem:[%s1 + $0x84] sm:$0xf]
    %v612 = vld [vmem:[%s1 + $0x88] sm:$0xf]
    %v613 = vld [vmem:[%s1 + $0x8c] sm:$0xf]
    %v614 = vld [vmem:[%s1 + $0x90] sm:$0xf]
    %v615 = vld [vmem:[%s1 + $0x94] sm:$0xf]
    %v616 = vld [vmem:[%s1 + $0x98] sm:$0xf]
    %v617 = vld [vmem:[%s1 + $0x9c] sm:$0xf]
    %v626 = vunpack.c.l.b16 %v610
    %v627 = vunpack.c.l.b16 %v611
    %v628 = vunpack.c.l.b16 %v612
    %v629 = vunpack.c.l.b16 %v613
    %v630 = vunpack.c.l.b16 %v614
    %v631 = vunpack.c.l.b16 %v615
    %v632 = vunpack.c.l.b16 %v616
    %v633 = vunpack.c.l.b16 %v617
    %v634 = vpack.c.b16 %v627, %v626
    %v635 = vpack.c.b16 %v629, %v628
    %v636 = vpack.c.b16 %v631, %v630
    %v637 = vpack.c.b16 %v633, %v632
    %v643 = vsel %vm124, %v602, 0
    %v646 = vsel %vm124, %v603, 0
    %v649 = vsel %vm124, %v604, 0
    %v652 = vsel %vm124, %v605, 0
    %v655 = vsel %vm124, %v606, 0
    %v658 = vsel %vm124, %v607, 0
    %v661 = vsel %vm124, %v608, 0
    %v664 = vsel %vm124, %v609, 0
    %666 = vmatpush.bf16.msra.mxu0 0
    %667 = vmatpush.bf16.msra.mxu0 0
    %668 = vmatpush.bf16.msra.mxu0 0
    %669 = vmatpush.bf16.msra.mxu0 0
    %670 = vmatpush.bf16.msra.mxu0 %v637
    %671 = vmatpush.bf16.msra.mxu0 %v636
    %672 = vmatpush.bf16.msra.mxu0 %v635
    %673 = vmatpush.bf16.msra.mxu0 %v634
    %674 = vmatmul.bf16.gmra.mxu0 %v643
    %v675 = vpop.f32.mrf.mxu0
    %v676 = vadd.f32 0.0, %v675
    %v677 = vpop.f32.mrf.mxu0
    %v678 = vadd.f32 0.0, %v677
    %679 = vmatmul.bf16.gmra.mxu0 %v646
    %v680 = vpop.f32.mrf.mxu0
    %v681 = vadd.f32 0.0, %v680
    %v682 = vpop.f32.mrf.mxu0
    %v683 = vadd.f32 0.0, %v682
    %684 = vmatmul.bf16.gmra.mxu0 %v649
    %v685 = vpop.f32.mrf.mxu0
    %v686 = vadd.f32 0.0, %v685
    %v687 = vpop.f32.mrf.mxu0
    %v688 = vadd.f32 0.0, %v687
    %689 = vmatmul.bf16.gmra.mxu0 %v652
    %v690 = vpop.f32.mrf.mxu0
    %v691 = vadd.f32 0.0, %v690
    %v692 = vpop.f32.mrf.mxu0
    %v693 = vadd.f32 0.0, %v692
    %694 = vmatmul.bf16.gmra.mxu0 %v655
    %v695 = vpop.f32.mrf.mxu0
    %v696 = vadd.f32 0.0, %v695
    %v697 = vpop.f32.mrf.mxu0
    %v698 = vadd.f32 0.0, %v697
    %699 = vmatmul.bf16.gmra.mxu0 %v658
    %v700 = vpop.f32.mrf.mxu0
    %v701 = vadd.f32 0.0, %v700
    %v702 = vpop.f32.mrf.mxu0
    %v703 = vadd.f32 0.0, %v702
    %704 = vmatmul.bf16.gmra.mxu0 %v661
    %v705 = vpop.f32.mrf.mxu0
    %v706 = vadd.f32 0.0, %v705
    %v707 = vpop.f32.mrf.mxu0
    %v708 = vadd.f32 0.0, %v707
    %709 = vmatmul.bf16.gmra.mxu0 %v664
    %v710 = vpop.f32.mrf.mxu0
    %v711 = vadd.f32 0.0, %v710
    %v712 = vpop.f32.mrf.mxu0
    %v713 = vadd.f32 0.0, %v712
    %714 = vdwg.mxu0
    %v715 = vadd.f32 %v570, %v676
    %v716 = vadd.f32 %v571, %v678
    %v717 = vadd.f32 %v572, %v681
    %v718 = vadd.f32 %v573, %v683
    %v719 = vadd.f32 %v574, %v686
    %v720 = vadd.f32 %v575, %v688
    %v721 = vadd.f32 %v576, %v691
    %v722 = vadd.f32 %v577, %v693
    %v723 = vadd.f32 %v578, %v696
    %v724 = vadd.f32 %v579, %v698
    %v725 = vadd.f32 %v580, %v701
    %v726 = vadd.f32 %v581, %v703
    %v727 = vadd.f32 %v582, %v706
    %v728 = vadd.f32 %v583, %v708
    %v729 = vadd.f32 %v584, %v711
    %v730 = vadd.f32 %v585, %v713
    %v731 = vld [vmem:[%s440 + $0x2] sm:$0xff]
    %v732 = vld [vmem:[%s440 + $0x12] sm:$0xff]
    %v733 = vld [vmem:[%s440 + $0x22] sm:$0xff]
    %v734 = vld [vmem:[%s440 + $0x32] sm:$0xff]
    %v735 = vld [vmem:[%s440 + $0x42] sm:$0xff]
    %v736 = vld [vmem:[%s440 + $0x52] sm:$0xff]
    %v737 = vld [vmem:[%s440 + $0x62] sm:$0xff]
    %v738 = vld [vmem:[%s440 + $0x72] sm:$0xff]
    %v739 = vld [vmem:[%s440 + $0xa2] sm:$0xff]
    %v740 = vld [vmem:[%s440 + $0xb2] sm:$0xff]
    %v741 = vld [vmem:[%s440 + $0xc2] sm:$0xff]
    %v742 = vld [vmem:[%s440 + $0xd2] sm:$0xff]
    %v743 = vld [vmem:[%s440 + $0xe2] sm:$0xff]
    %v744 = vld [vmem:[%s440 + $0xf2] sm:$0xff]
    %v745 = vld [vmem:[%s440 + $0x102] sm:$0xff]
    %v746 = vld [vmem:[%s440 + $0x112] sm:$0xff]
    %v747 = vpack.c.bf16 %v732, %v731
    %v748 = vpack.c.bf16 %v734, %v733
    %v749 = vpack.c.bf16 %v736, %v735
    %v750 = vpack.c.bf16 %v738, %v737
    %v751 = vpack.c.bf16 %v740, %v739
    %v752 = vpack.c.bf16 %v742, %v741
    %v753 = vpack.c.bf16 %v744, %v743
    %v754 = vpack.c.bf16 %v746, %v745
    %v755 = vld [vmem:[%s1 + $0xa0] sm:$0xf]
    %v756 = vld [vmem:[%s1 + $0xa4] sm:$0xf]
    %v757 = vld [vmem:[%s1 + $0xa8] sm:$0xf]
    %v758 = vld [vmem:[%s1 + $0xac] sm:$0xf]
    %v759 = vld [vmem:[%s1 + $0xb0] sm:$0xf]
    %v760 = vld [vmem:[%s1 + $0xb4] sm:$0xf]
    %v761 = vld [vmem:[%s1 + $0xb8] sm:$0xf]
    %v762 = vld [vmem:[%s1 + $0xbc] sm:$0xf]
    %v771 = vunpack.c.l.b16 %v755
    %v772 = vunpack.c.l.b16 %v756
    %v773 = vunpack.c.l.b16 %v757
    %v774 = vunpack.c.l.b16 %v758
    %v775 = vunpack.c.l.b16 %v759
    %v776 = vunpack.c.l.b16 %v760
    %v777 = vunpack.c.l.b16 %v761
    %v778 = vunpack.c.l.b16 %v762
    %v779 = vpack.c.b16 %v772, %v771
    %v780 = vpack.c.b16 %v774, %v773
    %v781 = vpack.c.b16 %v776, %v775
    %v782 = vpack.c.b16 %v778, %v777
    %v788 = vsel %vm124, %v747, 0
    %v791 = vsel %vm124, %v748, 0
    %v794 = vsel %vm124, %v749, 0
    %v797 = vsel %vm124, %v750, 0
    %v800 = vsel %vm124, %v751, 0
    %v803 = vsel %vm124, %v752, 0
    %v806 = vsel %vm124, %v753, 0
    %v809 = vsel %vm124, %v754, 0
    %811 = vmatpush.bf16.msra.mxu0 0
    %812 = vmatpush.bf16.msra.mxu0 0
    %813 = vmatpush.bf16.msra.mxu0 0
    %814 = vmatpush.bf16.msra.mxu0 0
    %815 = vmatpush.bf16.msra.mxu0 %v782
    %816 = vmatpush.bf16.msra.mxu0 %v781
    %817 = vmatpush.bf16.msra.mxu0 %v780
    %818 = vmatpush.bf16.msra.mxu0 %v779
    %819 = vmatmul.bf16.gmra.mxu0 %v788
    %v820 = vpop.f32.mrf.mxu0
    %v821 = vadd.f32 0.0, %v820
    %v822 = vpop.f32.mrf.mxu0
    %v823 = vadd.f32 0.0, %v822
    %824 = vmatmul.bf16.gmra.mxu0 %v791
    %v825 = vpop.f32.mrf.mxu0
    %v826 = vadd.f32 0.0, %v825
    %v827 = vpop.f32.mrf.mxu0
    %v828 = vadd.f32 0.0, %v827
    %829 = vmatmul.bf16.gmra.mxu0 %v794
    %v830 = vpop.f32.mrf.mxu0
    %v831 = vadd.f32 0.0, %v830
    %v832 = vpop.f32.mrf.mxu0
    %v833 = vadd.f32 0.0, %v832
    %834 = vmatmul.bf16.gmra.mxu0 %v797
    %v835 = vpop.f32.mrf.mxu0
    %v836 = vadd.f32 0.0, %v835
    %v837 = vpop.f32.mrf.mxu0
    %v838 = vadd.f32 0.0, %v837
    %839 = vmatmul.bf16.gmra.mxu0 %v800
    %v840 = vpop.f32.mrf.mxu0
    %v841 = vadd.f32 0.0, %v840
    %v842 = vpop.f32.mrf.mxu0
    %v843 = vadd.f32 0.0, %v842
    %844 = vmatmul.bf16.gmra.mxu0 %v803
    %v845 = vpop.f32.mrf.mxu0
    %v846 = vadd.f32 0.0, %v845
    %v847 = vpop.f32.mrf.mxu0
    %v848 = vadd.f32 0.0, %v847
    %849 = vmatmul.bf16.gmra.mxu0 %v806
    %v850 = vpop.f32.mrf.mxu0
    %v851 = vadd.f32 0.0, %v850
    %v852 = vpop.f32.mrf.mxu0
    %v853 = vadd.f32 0.0, %v852
    %854 = vmatmul.bf16.gmra.mxu0 %v809
    %v855 = vpop.f32.mrf.mxu0
    %v856 = vadd.f32 0.0, %v855
    %v857 = vpop.f32.mrf.mxu0
    %v858 = vadd.f32 0.0, %v857
    %859 = vdwg.mxu0
    %v860 = vadd.f32 %v715, %v821
    %v861 = vadd.f32 %v716, %v823
    %v862 = vadd.f32 %v717, %v826
    %v863 = vadd.f32 %v718, %v828
    %v864 = vadd.f32 %v719, %v831
    %v865 = vadd.f32 %v720, %v833
    %v866 = vadd.f32 %v721, %v836
    %v867 = vadd.f32 %v722, %v838
    %v868 = vadd.f32 %v723, %v841
    %v869 = vadd.f32 %v724, %v843
    %v870 = vadd.f32 %v725, %v846
    %v871 = vadd.f32 %v726, %v848
    %v872 = vadd.f32 %v727, %v851
    %v873 = vadd.f32 %v728, %v853
    %v874 = vadd.f32 %v729, %v856
    %v875 = vadd.f32 %v730, %v858
    %s876 = scalar_lea.vmem %s0, 32
    %v877 = vld [vmem:[%s876] sm:$0xff]
    %v878 = vld [vmem:[%s876 + $0x10] sm:$0xff]
    %v879 = vld [vmem:[%s876 + $0x20] sm:$0xff]
    %v880 = vld [vmem:[%s876 + $0x30] sm:$0xff]
    %v881 = vld [vmem:[%s876 + $0x40] sm:$0xff]
    %v882 = vld [vmem:[%s876 + $0x50] sm:$0xff]
    %v883 = vld [vmem:[%s876 + $0x60] sm:$0xff]
    %v884 = vld [vmem:[%s876 + $0x70] sm:$0xff]
    %v885 = vld [vmem:[%s876 + $0xa0] sm:$0xff]
    %v886 = vld [vmem:[%s876 + $0xb0] sm:$0xff]
    %v887 = vld [vmem:[%s876 + $0xc0] sm:$0xff]
    %v888 = vld [vmem:[%s876 + $0xd0] sm:$0xff]
    %v889 = vld [vmem:[%s876 + $0xe0] sm:$0xff]
    %v890 = vld [vmem:[%s876 + $0xf0] sm:$0xff]
    %v891 = vld [vmem:[%s876 + $0x100] sm:$0xff]
    %v892 = vld [vmem:[%s876 + $0x110] sm:$0xff]
    %v893 = vpack.c.bf16 %v878, %v877
    %v894 = vpack.c.bf16 %v880, %v879
    %v895 = vpack.c.bf16 %v882, %v881
    %v896 = vpack.c.bf16 %v884, %v883
    %v897 = vpack.c.bf16 %v886, %v885
    %v898 = vpack.c.bf16 %v888, %v887
    %v899 = vpack.c.bf16 %v890, %v889
    %v900 = vpack.c.bf16 %v892, %v891
    %v901 = vld [vmem:[%s1 + $0xc0] sm:$0xf]
    %v902 = vld [vmem:[%s1 + $0xc4] sm:$0xf]
    %v903 = vld [vmem:[%s1 + $0xc8] sm:$0xf]
    %v904 = vld [vmem:[%s1 + $0xcc] sm:$0xf]
    %v905 = vld [vmem:[%s1 + $0xd0] sm:$0xf]
    %v906 = vld [vmem:[%s1 + $0xd4] sm:$0xf]
    %v907 = vld [vmem:[%s1 + $0xd8] sm:$0xf]
    %v908 = vld [vmem:[%s1 + $0xdc] sm:$0xf]
    %v917 = vunpack.c.l.b16 %v901
    %v918 = vunpack.c.l.b16 %v902
    %v919 = vunpack.c.l.b16 %v903
    %v920 = vunpack.c.l.b16 %v904
    %v921 = vunpack.c.l.b16 %v905
    %v922 = vunpack.c.l.b16 %v906
    %v923 = vunpack.c.l.b16 %v907
    %v924 = vunpack.c.l.b16 %v908
    %v925 = vpack.c.b16 %v918, %v917
    %v926 = vpack.c.b16 %v920, %v919
    %v927 = vpack.c.b16 %v922, %v921
    %v928 = vpack.c.b16 %v924, %v923
    %v934 = vsel %vm124, %v893, 0
    %v937 = vsel %vm124, %v894, 0
    %v940 = vsel %vm124, %v895, 0
    %v943 = vsel %vm124, %v896, 0
    %v946 = vsel %vm124, %v897, 0
    %v949 = vsel %vm124, %v898, 0
    %v952 = vsel %vm124, %v899, 0
    %v955 = vsel %vm124, %v900, 0
    %957 = vmatpush.bf16.msra.mxu0 0
    %958 = vmatpush.bf16.msra.mxu0 0
    %959 = vmatpush.bf16.msra.mxu0 0
    %960 = vmatpush.bf16.msra.mxu0 0
    %961 = vmatpush.bf16.msra.mxu0 %v928
    %962 = vmatpush.bf16.msra.mxu0 %v927
    %963 = vmatpush.bf16.msra.mxu0 %v926
    %964 = vmatpush.bf16.msra.mxu0 %v925
    %965 = vmatmul.bf16.gmra.mxu0 %v934
    %v966 = vpop.f32.mrf.mxu0
    %v967 = vadd.f32 0.0, %v966
    %v968 = vpop.f32.mrf.mxu0
    %v969 = vadd.f32 0.0, %v968
    %970 = vmatmul.bf16.gmra.mxu0 %v937
    %v971 = vpop.f32.mrf.mxu0
    %v972 = vadd.f32 0.0, %v971
    %v973 = vpop.f32.mrf.mxu0
    %v974 = vadd.f32 0.0, %v973
    %975 = vmatmul.bf16.gmra.mxu0 %v940
    %v976 = vpop.f32.mrf.mxu0
    %v977 = vadd.f32 0.0, %v976
    %v978 = vpop.f32.mrf.mxu0
    %v979 = vadd.f32 0.0, %v978
    %980 = vmatmul.bf16.gmra.mxu0 %v943
    %v981 = vpop.f32.mrf.mxu0
    %v982 = vadd.f32 0.0, %v981
    %v983 = vpop.f32.mrf.mxu0
    %v984 = vadd.f32 0.0, %v983
    %985 = vmatmul.bf16.gmra.mxu0 %v946
    %v986 = vpop.f32.mrf.mxu0
    %v987 = vadd.f32 0.0, %v986
    %v988 = vpop.f32.mrf.mxu0
    %v989 = vadd.f32 0.0, %v988
    %990 = vmatmul.bf16.gmra.mxu0 %v949
    %v991 = vpop.f32.mrf.mxu0
    %v992 = vadd.f32 0.0, %v991
    %v993 = vpop.f32.mrf.mxu0
    %v994 = vadd.f32 0.0, %v993
    %995 = vmatmul.bf16.gmra.mxu0 %v952
    %v996 = vpop.f32.mrf.mxu0
    %v997 = vadd.f32 0.0, %v996
    %v998 = vpop.f32.mrf.mxu0
    %v999 = vadd.f32 0.0, %v998
    %1000 = vmatmul.bf16.gmra.mxu0 %v955
    %v1001 = vpop.f32.mrf.mxu0
    %v1002 = vadd.f32 0.0, %v1001
    %v1003 = vpop.f32.mrf.mxu0
    %v1004 = vadd.f32 0.0, %v1003
    %1005 = vdwg.mxu0
    %v1006 = vadd.f32 %v860, %v967
    %v1007 = vadd.f32 %v861, %v969
    %v1008 = vadd.f32 %v862, %v972
    %v1009 = vadd.f32 %v863, %v974
    %v1010 = vadd.f32 %v864, %v977
    %v1011 = vadd.f32 %v865, %v979
    %v1012 = vadd.f32 %v866, %v982
    %v1013 = vadd.f32 %v867, %v984
    %v1014 = vadd.f32 %v868, %v987
    %v1015 = vadd.f32 %v869, %v989
    %v1016 = vadd.f32 %v870, %v992
    %v1017 = vadd.f32 %v871, %v994
    %v1018 = vadd.f32 %v872, %v997
    %v1019 = vadd.f32 %v873, %v999
    %v1020 = vadd.f32 %v874, %v1002
    %v1021 = vadd.f32 %v875, %v1004
    %v1022 = vld [vmem:[%s876 + $0x1] sm:$0xff]
    %v1023 = vld [vmem:[%s876 + $0x11] sm:$0xff]
    %v1024 = vld [vmem:[%s876 + $0x21] sm:$0xff]
    %v1025 = vld [vmem:[%s876 + $0x31] sm:$0xff]
    %v1026 = vld [vmem:[%s876 + $0x41] sm:$0xff]
    %v1027 = vld [vmem:[%s876 + $0x51] sm:$0xff]
    %v1028 = vld [vmem:[%s876 + $0x61] sm:$0xff]
    %v1029 = vld [vmem:[%s876 + $0x71] sm:$0xff]
    %v1030 = vld [vmem:[%s876 + $0xa1] sm:$0xff]
    %v1031 = vld [vmem:[%s876 + $0xb1] sm:$0xff]
    %v1032 = vld [vmem:[%s876 + $0xc1] sm:$0xff]
    %v1033 = vld [vmem:[%s876 + $0xd1] sm:$0xff]
    %v1034 = vld [vmem:[%s876 + $0xe1] sm:$0xff]
    %v1035 = vld [vmem:[%s876 + $0xf1] sm:$0xff]
    %v1036 = vld [vmem:[%s876 + $0x101] sm:$0xff]
    %v1037 = vld [vmem:[%s876 + $0x111] sm:$0xff]
    %v1038 = vpack.c.bf16 %v1023, %v1022
    %v1039 = vpack.c.bf16 %v1025, %v1024
    %v1040 = vpack.c.bf16 %v1027, %v1026
    %v1041 = vpack.c.bf16 %v1029, %v1028
    %v1042 = vpack.c.bf16 %v1031, %v1030
    %v1043 = vpack.c.bf16 %v1033, %v1032
    %v1044 = vpack.c.bf16 %v1035, %v1034
    %v1045 = vpack.c.bf16 %v1037, %v1036
    %v1046 = vld [vmem:[%s1 + $0xe0] sm:$0xf]
    %v1047 = vld [vmem:[%s1 + $0xe4] sm:$0xf]
    %v1048 = vld [vmem:[%s1 + $0xe8] sm:$0xf]
    %v1049 = vld [vmem:[%s1 + $0xec] sm:$0xf]
    %v1050 = vld [vmem:[%s1 + $0xf0] sm:$0xf]
    %v1051 = vld [vmem:[%s1 + $0xf4] sm:$0xf]
    %v1052 = vld [vmem:[%s1 + $0xf8] sm:$0xf]
    %v1053 = vld [vmem:[%s1 + $0xfc] sm:$0xf]
    %v1062 = vunpack.c.l.b16 %v1046
    %v1063 = vunpack.c.l.b16 %v1047
    %v1064 = vunpack.c.l.b16 %v1048
    %v1065 = vunpack.c.l.b16 %v1049
    %v1066 = vunpack.c.l.b16 %v1050
    %v1067 = vunpack.c.l.b16 %v1051
    %v1068 = vunpack.c.l.b16 %v1052
    %v1069 = vunpack.c.l.b16 %v1053
    %v1070 = vpack.c.b16 %v1063, %v1062
    %v1071 = vpack.c.b16 %v1065, %v1064
    %v1072 = vpack.c.b16 %v1067, %v1066
    %v1073 = vpack.c.b16 %v1069, %v1068
    %v1079 = vsel %vm124, %v1038, 0
    %v1082 = vsel %vm124, %v1039, 0
    %v1085 = vsel %vm124, %v1040, 0
    %v1088 = vsel %vm124, %v1041, 0
    %v1091 = vsel %vm124, %v1042, 0
    %v1094 = vsel %vm124, %v1043, 0
    %v1097 = vsel %vm124, %v1044, 0
    %v1100 = vsel %vm124, %v1045, 0
    %1102 = vmatpush.bf16.msra.mxu0 0
    %1103 = vmatpush.bf16.msra.mxu0 0
    %1104 = vmatpush.bf16.msra.mxu0 0
    %1105 = vmatpush.bf16.msra.mxu0 0
    %1106 = vmatpush.bf16.msra.mxu0 %v1073
    %1107 = vmatpush.bf16.msra.mxu0 %v1072
    %1108 = vmatpush.bf16.msra.mxu0 %v1071
    %1109 = vmatpush.bf16.msra.mxu0 %v1070
    %1110 = vmatmul.bf16.gmra.mxu0 %v1079
    %v1111 = vpop.f32.mrf.mxu0
    %v1112 = vadd.f32 0.0, %v1111
    %v1113 = vpop.f32.mrf.mxu0
    %v1114 = vadd.f32 0.0, %v1113
    %1115 = vmatmul.bf16.gmra.mxu0 %v1082
    %v1116 = vpop.f32.mrf.mxu0
    %v1117 = vadd.f32 0.0, %v1116
    %v1118 = vpop.f32.mrf.mxu0
    %v1119 = vadd.f32 0.0, %v1118
    %1120 = vmatmul.bf16.gmra.mxu0 %v1085
    %v1121 = vpop.f32.mrf.mxu0
    %v1122 = vadd.f32 0.0, %v1121
    %v1123 = vpop.f32.mrf.mxu0
    %v1124 = vadd.f32 0.0, %v1123
    %1125 = vmatmul.bf16.gmra.mxu0 %v1088
    %v1126 = vpop.f32.mrf.mxu0
    %v1127 = vadd.f32 0.0, %v1126
    %v1128 = vpop.f32.mrf.mxu0
    %v1129 = vadd.f32 0.0, %v1128
    %1130 = vmatmul.bf16.gmra.mxu0 %v1091
    %v1131 = vpop.f32.mrf.mxu0
    %v1132 = vadd.f32 0.0, %v1131
    %v1133 = vpop.f32.mrf.mxu0
    %v1134 = vadd.f32 0.0, %v1133
    %1135 = vmatmul.bf16.gmra.mxu0 %v1094
    %v1136 = vpop.f32.mrf.mxu0
    %v1137 = vadd.f32 0.0, %v1136
    %v1138 = vpop.f32.mrf.mxu0
    %v1139 = vadd.f32 0.0, %v1138
    %1140 = vmatmul.bf16.gmra.mxu0 %v1097
    %v1141 = vpop.f32.mrf.mxu0
    %v1142 = vadd.f32 0.0, %v1141
    %v1143 = vpop.f32.mrf.mxu0
    %v1144 = vadd.f32 0.0, %v1143
    %1145 = vmatmul.bf16.gmra.mxu0 %v1100
    %v1146 = vpop.f32.mrf.mxu0
    %v1147 = vadd.f32 0.0, %v1146
    %v1148 = vpop.f32.mrf.mxu0
    %v1149 = vadd.f32 0.0, %v1148
    %1150 = vdwg.mxu0
    %v1151 = vadd.f32 %v1006, %v1112
    %v1152 = vadd.f32 %v1007, %v1114
    %v1153 = vadd.f32 %v1008, %v1117
    %v1154 = vadd.f32 %v1009, %v1119
    %v1155 = vadd.f32 %v1010, %v1122
    %v1156 = vadd.f32 %v1011, %v1124
    %v1157 = vadd.f32 %v1012, %v1127
    %v1158 = vadd.f32 %v1013, %v1129
    %v1159 = vadd.f32 %v1014, %v1132
    %v1160 = vadd.f32 %v1015, %v1134
    %v1161 = vadd.f32 %v1016, %v1137
    %v1162 = vadd.f32 %v1017, %v1139
    %v1163 = vadd.f32 %v1018, %v1142
    %v1164 = vadd.f32 %v1019, %v1144
    %v1165 = vadd.f32 %v1020, %v1147
    %v1166 = vadd.f32 %v1021, %v1149
    %v1167 = vld [vmem:[%s876 + $0x2] sm:$0xff]
    %v1168 = vld [vmem:[%s876 + $0x12] sm:$0xff]
    %v1169 = vld [vmem:[%s876 + $0x22] sm:$0xff]
    %v1170 = vld [vmem:[%s876 + $0x32] sm:$0xff]
    %v1171 = vld [vmem:[%s876 + $0x42] sm:$0xff]
    %v1172 = vld [vmem:[%s876 + $0x52] sm:$0xff]
    %v1173 = vld [vmem:[%s876 + $0x62] sm:$0xff]
    %v1174 = vld [vmem:[%s876 + $0x72] sm:$0xff]
    %v1175 = vld [vmem:[%s876 + $0xa2] sm:$0xff]
    %v1176 = vld [vmem:[%s876 + $0xb2] sm:$0xff]
    %v1177 = vld [vmem:[%s876 + $0xc2] sm:$0xff]
    %v1178 = vld [vmem:[%s876 + $0xd2] sm:$0xff]
    %v1179 = vld [vmem:[%s876 + $0xe2] sm:$0xff]
    %v1180 = vld [vmem:[%s876 + $0xf2] sm:$0xff]
    %v1181 = vld [vmem:[%s876 + $0x102] sm:$0xff]
    %v1182 = vld [vmem:[%s876 + $0x112] sm:$0xff]
    %v1183 = vpack.c.bf16 %v1168, %v1167
    %v1184 = vpack.c.bf16 %v1170, %v1169
    %v1185 = vpack.c.bf16 %v1172, %v1171
    %v1186 = vpack.c.bf16 %v1174, %v1173
    %v1187 = vpack.c.bf16 %v1176, %v1175
    %v1188 = vpack.c.bf16 %v1178, %v1177
    %v1189 = vpack.c.bf16 %v1180, %v1179
    %v1190 = vpack.c.bf16 %v1182, %v1181
    %v1191 = vld [vmem:[%s1 + $0x100] sm:$0xf]
    %v1192 = vld [vmem:[%s1 + $0x104] sm:$0xf]
    %v1193 = vld [vmem:[%s1 + $0x108] sm:$0xf]
    %v1194 = vld [vmem:[%s1 + $0x10c] sm:$0xf]
    %v1195 = vld [vmem:[%s1 + $0x110] sm:$0xf]
    %v1196 = vld [vmem:[%s1 + $0x114] sm:$0xf]
    %v1197 = vld [vmem:[%s1 + $0x118] sm:$0xf]
    %v1198 = vld [vmem:[%s1 + $0x11c] sm:$0xf]
    %v1207 = vunpack.c.l.b16 %v1191
    %v1208 = vunpack.c.l.b16 %v1192
    %v1209 = vunpack.c.l.b16 %v1193
    %v1210 = vunpack.c.l.b16 %v1194
    %v1211 = vunpack.c.l.b16 %v1195
    %v1212 = vunpack.c.l.b16 %v1196
    %v1213 = vunpack.c.l.b16 %v1197
    %v1214 = vunpack.c.l.b16 %v1198
    %v1215 = vpack.c.b16 %v1208, %v1207
    %v1216 = vpack.c.b16 %v1210, %v1209
    %v1217 = vpack.c.b16 %v1212, %v1211
    %v1218 = vpack.c.b16 %v1214, %v1213
    %v1224 = vsel %vm124, %v1183, 0
    %v1227 = vsel %vm124, %v1184, 0
    %v1230 = vsel %vm124, %v1185, 0
    %v1233 = vsel %vm124, %v1186, 0
    %v1236 = vsel %vm124, %v1187, 0
    %v1239 = vsel %vm124, %v1188, 0
    %v1242 = vsel %vm124, %v1189, 0
    %v1245 = vsel %vm124, %v1190, 0
    %1247 = vmatpush.bf16.msra.mxu0 0
    %1248 = vmatpush.bf16.msra.mxu0 0
    %1249 = vmatpush.bf16.msra.mxu0 0
    %1250 = vmatpush.bf16.msra.mxu0 0
    %1251 = vmatpush.bf16.msra.mxu0 %v1218
    %1252 = vmatpush.bf16.msra.mxu0 %v1217
    %1253 = vmatpush.bf16.msra.mxu0 %v1216
    %1254 = vmatpush.bf16.msra.mxu0 %v1215
    %1255 = vmatmul.bf16.gmra.mxu0 %v1224
    %v1256 = vpop.f32.mrf.mxu0
    %v1257 = vadd.f32 0.0, %v1256
    %v1258 = vpop.f32.mrf.mxu0
    %v1259 = vadd.f32 0.0, %v1258
    %1260 = vmatmul.bf16.gmra.mxu0 %v1227
    %v1261 = vpop.f32.mrf.mxu0
    %v1262 = vadd.f32 0.0, %v1261
    %v1263 = vpop.f32.mrf.mxu0
    %v1264 = vadd.f32 0.0, %v1263
    %1265 = vmatmul.bf16.gmra.mxu0 %v1230
    %v1266 = vpop.f32.mrf.mxu0
    %v1267 = vadd.f32 0.0, %v1266
    %v1268 = vpop.f32.mrf.mxu0
    %v1269 = vadd.f32 0.0, %v1268
    %1270 = vmatmul.bf16.gmra.mxu0 %v1233
    %v1271 = vpop.f32.mrf.mxu0
    %v1272 = vadd.f32 0.0, %v1271
    %v1273 = vpop.f32.mrf.mxu0
    %v1274 = vadd.f32 0.0, %v1273
    %1275 = vmatmul.bf16.gmra.mxu0 %v1236
    %v1276 = vpop.f32.mrf.mxu0
    %v1277 = vadd.f32 0.0, %v1276
    %v1278 = vpop.f32.mrf.mxu0
    %v1279 = vadd.f32 0.0, %v1278
    %1280 = vmatmul.bf16.gmra.mxu0 %v1239
    %v1281 = vpop.f32.mrf.mxu0
    %v1282 = vadd.f32 0.0, %v1281
    %v1283 = vpop.f32.mrf.mxu0
    %v1284 = vadd.f32 0.0, %v1283
    %1285 = vmatmul.bf16.gmra.mxu0 %v1242
    %v1286 = vpop.f32.mrf.mxu0
    %v1287 = vadd.f32 0.0, %v1286
    %v1288 = vpop.f32.mrf.mxu0
    %v1289 = vadd.f32 0.0, %v1288
    %1290 = vmatmul.bf16.gmra.mxu0 %v1245
    %v1291 = vpop.f32.mrf.mxu0
    %v1292 = vadd.f32 0.0, %v1291
    %v1293 = vpop.f32.mrf.mxu0
    %v1294 = vadd.f32 0.0, %v1293
    %1295 = vdwg.mxu0
    %v1296 = vadd.f32 %v1151, %v1257
    %v1297 = vadd.f32 %v1152, %v1259
    %v1298 = vadd.f32 %v1153, %v1262
    %v1299 = vadd.f32 %v1154, %v1264
    %v1300 = vadd.f32 %v1155, %v1267
    %v1301 = vadd.f32 %v1156, %v1269
    %v1302 = vadd.f32 %v1157, %v1272
    %v1303 = vadd.f32 %v1158, %v1274
    %v1304 = vadd.f32 %v1159, %v1277
    %v1305 = vadd.f32 %v1160, %v1279
    %v1306 = vadd.f32 %v1161, %v1282
    %v1307 = vadd.f32 %v1162, %v1284
    %v1308 = vadd.f32 %v1163, %v1287
    %v1309 = vadd.f32 %v1164, %v1289
    %v1310 = vadd.f32 %v1165, %v1292
    %v1311 = vadd.f32 %v1166, %v1294
    %v1312 = vperm.slane %v35, 0
    %v1313 = vadd.f32 %v1296, %v1312
    %v1314 = vadd.f32 %v1297, %v1312
    %v1315 = vadd.f32 %v1298, %v1312
    %v1316 = vadd.f32 %v1299, %v1312
    %v1317 = vadd.f32 %v1300, %v1312
    %v1318 = vadd.f32 %v1301, %v1312
    %v1319 = vadd.f32 %v1302, %v1312
    %v1320 = vadd.f32 %v1303, %v1312
    %v1321 = vadd.f32 %v1304, %v1312
    %v1322 = vadd.f32 %v1305, %v1312
    %v1323 = vadd.f32 %v1306, %v1312
    %v1324 = vadd.f32 %v1307, %v1312
    %v1325 = vadd.f32 %v1308, %v1312
    %v1326 = vadd.f32 %v1309, %v1312
    %v1327 = vadd.f32 %v1310, %v1312
    %v1328 = vadd.f32 %v1311, %v1312
    %v1329 = vlaneseq
    %v1330 = vshrl.u32 %v1329, 7
    %v1331 = vlaneseq
    %v1332 = vand.u32 %v1331, 127
    %v1333 = vmul.u32 %v1330, 64
    %vm1334 = vcmp.ge.s32.totalorder %v1332, %v1333
    %v1335 = vadd.s32 %v1333, 64
    %vm1336 = vcmp.lt.s32.totalorder %v1332, %v1335
    %vm1337 = vmand %vm1334, %vm1336
    %v1338 = vsel %vm1337, 0.015625, 0.0
    %1339 = vmatpush.msra.mxu0 %v1328
    %1340 = vmatpush.msra.mxu0 %v1327
    %1341 = vmatpush.msra.mxu0 %v1326
    %1342 = vmatpush.msra.mxu0 %v1325
    %1343 = vmatpush.msra.mxu0 %v1324
    %1344 = vmatpush.msra.mxu0 %v1323
    %1345 = vmatpush.msra.mxu0 %v1322
    %1346 = vmatpush.msra.mxu0 %v1321
    %1347 = vmatpush.msra.mxu0 %v1320
    %1348 = vmatpush.msra.mxu0 %v1319
    %1349 = vmatpush.msra.mxu0 %v1318
    %1350 = vmatpush.msra.mxu0 %v1317
    %1351 = vmatpush.msra.mxu0 %v1316
    %1352 = vmatpush.msra.mxu0 %v1315
    %1353 = vmatpush.msra.mxu0 %v1314
    %1354 = vmatpush.msra.mxu0 %v1313
    %1355 = vmatmul.f32.gmra.mxu0 %v1338
    %v1356 = vpop.f32.mrf.mxu0
    %v1357 = vadd.f32 0.0, %v1356
    %1358 = vdwg.mxu0
    %v1359 = vpack.c.bf16 %v1357, %v1357
    %v1360 = vperm.slane %v35, 1
    %v1369 = vunpack.c.l.b16 %v18
    %v1370 = vunpack.c.l.b16 %v19
    %v1371 = vunpack.c.l.b16 %v20
    %v1372 = vunpack.c.l.b16 %v21
    %v1373 = vunpack.c.l.b16 %v22
    %v1374 = vunpack.c.l.b16 %v23
    %v1375 = vunpack.c.l.b16 %v24
    %v1376 = vunpack.c.l.b16 %v25
    %v1377 = vpack.c.b16 %v1370, %v1369
    %v1378 = vpack.c.b16 %v1372, %v1371
    %v1379 = vpack.c.b16 %v1374, %v1373
    %v1380 = vpack.c.b16 %v1376, %v1375
    %v1386 = vsel %vm124, %v1359, 0
    %1388 = vmatpush.bf16.msra.mxu0 0
    %1389 = vmatpush.bf16.msra.mxu0 0
    %1390 = vmatpush.bf16.msra.mxu0 0
    %1391 = vmatpush.bf16.msra.mxu0 0
    %1392 = vmatpush.bf16.msra.mxu0 %v1380
    %1393 = vmatpush.bf16.msra.mxu0 %v1379
    %1394 = vmatpush.bf16.msra.mxu0 %v1378
    %1395 = vmatpush.bf16.msra.mxu0 %v1377
    %1396 = vmatmul.bf16.gmra.mxu0 %v1386
    %v1397 = vpop.f32.mrf.mxu0
    %v1398 = vadd.f32 %v1360, %v1397
    %v1399 = vpop.f32.mrf.mxu0
    %1400 = vdwg.mxu0
    %vm1401 = vcmp.gt.f32.partialorder %v1398, 0.0
    %v1402 = vperm.slane %v35, 2
    %v1403 = vmul.f32 %v1402, %v1398
    %v1404 = vsel %vm1401, %v1398, %v1403
    %v1405 = vpack.c.bf16 %v1404, %v1404
    %v1406 = vperm.slane %v35, 3
    %v1415 = vunpack.c.l.b16 %v26
    %v1416 = vunpack.c.l.b16 %v27
    %v1417 = vunpack.c.l.b16 %v28
    %v1418 = vunpack.c.l.b16 %v29
    %v1419 = vunpack.c.l.b16 %v30
    %v1420 = vunpack.c.l.b16 %v31
    %v1421 = vunpack.c.l.b16 %v32
    %v1422 = vunpack.c.l.b16 %v33
    %v1423 = vpack.c.b16 %v1416, %v1415
    %v1424 = vpack.c.b16 %v1418, %v1417
    %v1425 = vpack.c.b16 %v1420, %v1419
    %v1426 = vpack.c.b16 %v1422, %v1421
    %v1432 = vsel %vm124, %v1405, 0
    %1434 = vmatpush.bf16.msra.mxu0 0
    %1435 = vmatpush.bf16.msra.mxu0 0
    %1436 = vmatpush.bf16.msra.mxu0 0
    %1437 = vmatpush.bf16.msra.mxu0 0
    %1438 = vmatpush.bf16.msra.mxu0 %v1426
    %1439 = vmatpush.bf16.msra.mxu0 %v1425
    %1440 = vmatpush.bf16.msra.mxu0 %v1424
    %1441 = vmatpush.bf16.msra.mxu0 %v1423
    %1442 = vmatmul.bf16.gmra.mxu0 %v1432
    %v1443 = vpop.f32.mrf.mxu0
    %v1444 = vadd.f32 %v1406, %v1443
    %v1445 = vpop.f32.mrf.mxu0
    %1446 = vdwg.mxu0
    %1447 = vst [vmem:[#allocation2] sm:$0xff] 0.0
    %vm1448 = vcmask 517120
    %1449 = vst.msk [vmem:[#allocation2] sm:$0x3] %vm1448, %v1444
    %v1450 = vld [vmem:[%s2] sm:$0xff]
    %v1451 = vld [vmem:[%s2 + $0x8] sm:$0xff]
    %v1452 = vld [vmem:[%s2 + $0x10] sm:$0xff]
    %v1453 = vld [vmem:[%s2 + $0x18] sm:$0xff]
    %v1454 = vld [vmem:[%s2 + $0x20] sm:$0xff]
    %v1455 = vld [vmem:[%s2 + $0x28] sm:$0xff]
    %v1456 = vld [vmem:[%s2 + $0x30] sm:$0xff]
    %v1457 = vld [vmem:[%s2 + $0x38] sm:$0xff]
    %v1458 = vadd.f32 %v1450, %v1450
    %v1459 = vadd.f32 %v1451, %v1451
    %v1460 = vadd.f32 %v1452, %v1452
    %v1461 = vadd.f32 %v1453, %v1453
    %v1462 = vadd.f32 %v1454, %v1454
    %v1463 = vadd.f32 %v1455, %v1455
    %v1464 = vadd.f32 %v1456, %v1456
    %v1465 = vadd.f32 %v1457, %v1457
    %1466 = vst [vmem:[%s3] sm:$0xff] %v1458
    %1467 = vst [vmem:[%s3 + $0x8] sm:$0xff] %v1459
    %1468 = vst [vmem:[%s3 + $0x10] sm:$0xff] %v1460
    %1469 = vst [vmem:[%s3 + $0x18] sm:$0xff] %v1461
    %1470 = vst [vmem:[%s3 + $0x20] sm:$0xff] %v1462
    %1471 = vst [vmem:[%s3 + $0x28] sm:$0xff] %v1463
    %1472 = vst [vmem:[%s3 + $0x30] sm:$0xff] %v1464
    %1473 = vst [vmem:[%s3 + $0x38] sm:$0xff] %v1465
    // Predicated region
    $region14: #{_lambda_.1} parent=1 // pred_check
      _
    $region15: #{_lambda_.1} parent=1 // pred_check_branch
      %1475 = sbr.rel (0) target = $region17
    $region16: #{_lambda_.1} parent=1 // pred_region
      _
    $region17: #{_lambda_.1} parent=1 // pred_fallthru
      _
    // Predicated region
    $region18: #{_lambda_.1} parent=1 // pred_check
      _
    $region19: #{_lambda_.1} parent=1 // pred_check_branch
      %1477 = sbr.rel (0) target = $region21
    $region20: #{_lambda_.1} parent=1 // pred_region
      %1479 = vsyncadd [#allocation3], 0
      %s1481 = sshll.u32 [#allocation2], 4
      %s1482 = int_to_ptr.vmem [resolvable:$true] %s1481
      %s1483 = sshll.u32 %s4, 4
      %s1484 = int_to_ptr.hbm [resolvable:$true] %s1483
      %1486 = dma.vmem_to_hbm [thread:$0]  %s1482, 128, %s1484, [#allocation3]
    $region21: #{_lambda_.1} parent=1 // pred_fallthru
      _
    // Predicated region
    $region22: #{_lambda_.1} parent=1 // pred_check
      _
    $region23: #{_lambda_.1} parent=1 // pred_check_branch
      %1488 = sbr.rel (0) target = $region25
    $region24: #{_lambda_.1} parent=1 // pred_region
      _
    $region25: #{_lambda_.1} parent=1 // pred_fallthru
      _
    // Predicated region
    $region26: #{_lambda_.1} parent=1 // pred_check
      _
    $region27: #{_lambda_.1} parent=1 // pred_check_branch
      %1490 = sbr.rel (0) target = $region29
    $region28: #{_lambda_.1} parent=1 // pred_region
      %1492 = dma.done [#allocation3], 128
    $region29: #{_lambda_.1} parent=1 // pred_fallthru
      _
    %1493 = vsyncpa [#allocation3], 1

</llo_original>
